<compile_context>
chip_gen: v6e
topology: v6e:2x2x1
jax: 0.10.0
libtpu: 0.0.40
codegen_flags: <defaults>
</compile_context>

<pallas_src>
import functools
import math

import jax
import jax.numpy as jnp
from jax import lax
from jax.experimental import pallas as pl
from jax.experimental.pallas import tpu as pltpu


# ---------------------------------------------------------------------------
# Pallas kernels
# ---------------------------------------------------------------------------

def conv_stats_kernel(p_ref, w_ref, y_ref, psum_ref, psq_ref):
    """Fused ReLU + per-phase matmul (bf16 MXU, f32 accum) + per-tile BN partial sums."""
    a = jnp.maximum(p_ref[0], 0)                                   # ReLU on bf16 patches
    y = jnp.dot(a, w_ref[0], preferred_element_type=jnp.float32)   # (tm, Cout) f32
    y_ref[...] = y.reshape((1,) + y.shape)

    # Column sum / sum-of-squares via the MXU ("ones @ y"): keeps the reduction
    # off the VPU/XLU and directly yields the 8-sublane-padded stats block.
    ones8 = jnp.ones((8, y.shape[0]), jnp.float32)
    s8 = jnp.dot(ones8, y, preferred_element_type=jnp.float32)       # (8, Cout)
    q8 = jnp.dot(ones8, y * y, preferred_element_type=jnp.float32)   # (8, Cout)
    psum_ref[...] = s8.reshape((1, 1) + s8.shape)
    psq_ref[...] = q8.reshape((1, 1) + q8.shape)


def bn_apply_kernel(y_ref, scale_ref, shift_ref, o_ref):
    """Lane-dense elementwise BatchNorm apply: o = y * scale + shift (in place)."""
    o_ref[...] = y_ref[...] * scale_ref[...] + shift_ref[...]


# ---------------------------------------------------------------------------
# Helpers
# ---------------------------------------------------------------------------

def _pick_rows(total_rows, bytes_per_row, *, budget_bytes, max_rows, min_rows):
    """Largest power-of-two row tile that divides total_rows and fits the budget."""
    cap = max(min_rows, min(max_rows, budget_bytes // max(1, bytes_per_row)))
    t = 1
    while t * 2 <= cap:
        t *= 2
    while t >= min_rows:
        if total_rows % t == 0:
            return t
        t //= 2
    return total_rows  # single full block (full-extent blocks are always legal)


# ---------------------------------------------------------------------------
# Forward pass
# ---------------------------------------------------------------------------

@functools.partial(jax.jit, static_argnames=("eps",))
def up_block_forward(x, w_t, gamma, beta, *, eps=1e-5):
    """x: (N, Cin, H, W) f32 NCHW. w_t: ConvTranspose2d weight (Cin, Cout, 4, 4).
    Returns (N, Cout, 2H, 2W) f32 NCHW, matching UpBlock.forward (train-mode BN);
    the conv matmul runs in bf16 with f32 accumulation."""
    N, Cin, H, W = x.shape
    Cin2, Cout, k, k2 = w_t.shape
    assert (Cin2, k, k2) == (Cin, 4, 4), "kernel assumes k=4, s=2, p=1"
    Ho, Wo = 2 * H, 2 * W
    NHW = N * H * W
    K = 4 * Cin                      # 2x2 window x Cin per output phase

    # ---- glue: sub-pixel (4-phase) im2col on the un-dilated input (NHWC) -----
    # Output phase (r, c), r, c in {0, 1}, is a 2x2 stride-1 conv:
    #   out[n, co, 2i+r, 2j+c] =
    #     sum_{dy,dx,ci} xpad[n, i+r+dy, j+c+dx, ci] * w_t[ci, co, 3-r-2dy, 3-c-2dx]
    xt = jnp.transpose(x, (0, 2, 3, 1))                            # NHWC
    x_pad = jnp.pad(xt, ((0, 0), (1, 1), (1, 1), (0, 0)))          # 1-px zero halo
    wf = w_t[:, :, ::-1, ::-1]                                     # flipped taps
    patch_list, wmat_list = [], []
    for r in (0, 1):
        for c in (0, 1):
            taps = [x_pad[:, r + dy:r + dy + H, c + dx:c + dx + W, :]
                    for dy in (0, 1) for dx in (0, 1)]
            patch_list.append(jnp.stack(taps, axis=3).reshape(NHW, K))
            wsub = wf[:, :, r::2, c::2]                            # (Cin, Cout, 2, 2)
            wmat_list.append(jnp.transpose(wsub, (2, 3, 0, 1)).reshape(K, Cout))
    patches = jnp.stack(patch_list, axis=0).astype(jnp.bfloat16)   # (4, NHW, K)
    wmats = jnp.stack(wmat_list, axis=0).astype(jnp.bfloat16)      # (4, K, Cout)

    vmem_limit = 48 * 1024 * 1024

    # ---- Pallas pass 1: ReLU + conv matmul + per-tile BN partial statistics --
    tm = _pick_rows(NHW, K * 2 + Cout * 4,
                    budget_bytes=8 << 20, max_rows=1024, min_rows=16)
    nb = NHW // tm
    y, psum, psq = pl.pallas_call(
        conv_stats_kernel,
        out_shape=(jax.ShapeDtypeStruct((4, NHW, Cout), jnp.float32),
                   jax.ShapeDtypeStruct((4, nb, 8, Cout), jnp.float32),
                   jax.ShapeDtypeStruct((4, nb, 8, Cout), jnp.float32)),
        grid=(4, nb),
        in_specs=[pl.BlockSpec((1, tm, K), lambda ph, i: (ph, i, 0)),
                  pl.BlockSpec((1, K, Cout), lambda ph, i: (ph, 0, 0))],
        out_specs=(pl.BlockSpec((1, tm, Cout), lambda ph, i: (ph, i, 0)),
                   pl.BlockSpec((1, 1, 8, Cout), lambda ph, i: (ph, i, 0, 0)),
                   pl.BlockSpec((1, 1, 8, Cout), lambda ph, i: (ph, i, 0, 0))),
        compiler_params=pltpu.CompilerParams(
            dimension_semantics=("parallel", "parallel"),
            vmem_limit_bytes=vmem_limit),
    )(patches, wmats)

    # ---- tiny scalar glue: batch statistics -> BN scale/shift (biased var) ---
    m_total = jnp.float32(4 * NHW)                        # = N * Ho * Wo per channel
    tot_sum = jnp.sum(psum[:, :, 0, :], axis=(0, 1))
    tot_sq = jnp.sum(psq[:, :, 0, :], axis=(0, 1))
    mean = tot_sum / m_total
    var = jnp.maximum(tot_sq / m_total - mean * mean, 0.0)
    scale = gamma.astype(jnp.float32) * lax.rsqrt(var + eps)
    shift = beta.astype(jnp.float32) - mean * scale

    # ---- Pallas pass 2: lane-dense, in-place BatchNorm apply ------------------
    mult = 128 // math.gcd(Cout, 128)        # smallest t with (Cout * t) % 128 == 0
    lw = Cout * mult if (4 * NHW) % mult == 0 else Cout
    rows = (4 * NHW * Cout) // lw
    y2d = y.reshape(rows, lw)                # free row-major view of the HBM array
    reps = lw // Cout
    scale_row = jnp.tile(scale, reps).reshape(1, lw)
    shift_row = jnp.tile(shift, reps).reshape(1, lw)

    br = _pick_rows(rows, lw * 4, budget_bytes=4 << 20, max_rows=2048, min_rows=8)
    out2d = pl.pallas_call(
        bn_apply_kernel,
        out_shape=jax.ShapeDtypeStruct((rows, lw), jnp.float32),
        grid=(rows // br,),
        in_specs=[pl.BlockSpec((br, lw), lambda i: (i, 0)),
                  pl.BlockSpec((1, lw), lambda i: (0, 0)),
                  pl.BlockSpec((1, lw), lambda i: (0, 0))],
        out_specs=pl.BlockSpec((br, lw), lambda i: (i, 0)),
        input_output_aliases={0: 0},         # normalize y in place
        compiler_params=pltpu.CompilerParams(
            dimension_semantics=("parallel",),
            vmem_limit_bytes=vmem_limit),
    )(y2d, scale_row, shift_row)

    # ---- interleave the 4 output phases and return PyTorch NCHW ---------------
    out = out2d.reshape(2, 2, N, H, W, Cout)              # (r, c, n, i, j, co)
    out = jnp.transpose(out, (2, 5, 3, 0, 4, 1))          # (n, co, i, r, j, c)
    return out.reshape(N, Cout, Ho, Wo)


# ---------------------------------------------------------------------------
# Pure-JAX reference (ReLU -> ConvTranspose2d -> BatchNorm2d, training mode)
# ---------------------------------------------------------------------------

def _reference(x, w_t, gamma, beta, *, eps=1e-5, matmul_dtype=jnp.float32):
    xr = jnp.maximum(x, 0.0)
    w_conv = jnp.transpose(w_t[:, :, ::-1, ::-1], (1, 0, 2, 3))    # (Cout, Cin, k, k)
    y = lax.conv_general_dilated(
        xr.astype(matmul_dtype), w_conv.astype(matmul_dtype),
        window_strides=(1, 1), padding=[(2, 2), (2, 2)], lhs_dilation=(2, 2),
        dimension_numbers=("NCHW", "OIHW", "NCHW"),
        preferred_element_type=jnp.float32)
    mean = jnp.mean(y, axis=(0, 2, 3), keepdims=True)
    var = jnp.mean((y - mean) ** 2, axis=(0, 2, 3), keepdims=True)
    g = gamma.reshape(1, -1, 1, 1)
    b = beta.reshape(1, -1, 1, 1)
    return (y - mean) * lax.rsqrt(var + eps) * g + b


if __name__ == "__main__":
    key = jax.random.PRNGKey(0)
    k_x, k_w, k_g, k_b = jax.random.split(key, 4)

    N, Cin, H, W = 2, 4, 16, 16
    Cout, ksz = 8, 4

    x = jax.random.normal(k_x, (N, Cin, H, W), dtype=jnp.float32)
    # ConvTranspose2d weight shape: (in_dim, out_dim, k, k), bias=False
    w_t = jax.random.normal(k_w, (Cin, Cout, ksz, ksz), dtype=jnp.float32) * 0.1
    # BatchNorm2d affine params (deterministic synthetic init)
    gamma = 1.0 + 0.1 * jax.random.normal(k_g, (Cout,), dtype=jnp.float32)
    beta = 0.1 * jax.random.normal(k_b, (Cout,), dtype=jnp.float32)

    out = jax.block_until_ready(up_block_forward(x, w_t, gamma, beta))
    assert out.shape == (N, Cout, 2 * H, 2 * W), out.shape

    # Tight check vs a reference that applies the same bf16 quantization to the
    # conv operands (both accumulate in f32), plus a looser sanity check vs f32.
    ref_bf16 = _reference(x, w_t, gamma, beta, matmul_dtype=jnp.bfloat16)
    ref_f32 = _reference(x, w_t, gamma, beta, matmul_dtype=jnp.float32)
    assert jnp.allclose(out, ref_bf16, atol=2e-3, rtol=2e-3), "mismatch vs bf16-conv reference"
    assert jnp.allclose(out, ref_f32, atol=6e-2, rtol=6e-2), "mismatch vs f32 reference"

    print("KERNEL_OK")
</pallas_src>

<mosaic_0001>
module attributes {stable_mosaic.version = 11 : i64} {
  func.func @conv_stats_kernel(%arg0: i32, %arg1: i32, %arg2: memref<1x512x16xbf16, #tpu.memory_space<vmem>>, %arg3: memref<1x16x8xbf16, #tpu.memory_space<vmem>>, %arg4: memref<1x512x8xf32, #tpu.memory_space<vmem>>, %arg5: memref<1x1x8x8xf32, #tpu.memory_space<vmem>>, %arg6: memref<1x1x8x8xf32, #tpu.memory_space<vmem>>) attributes {dimension_semantics = [#tpu.dimension_semantics<parallel>, #tpu.dimension_semantics<parallel>], iteration_bounds = array<i64: 4, 1>, scalar_prefetch = 0 : i64, scratch_operands = 0 : i64, tpu.core_type = #tpu.core_type<tc>, window_params = [{transform_indices = @transform_0, window_bounds = array<i64: 1, 512, 16>}, {transform_indices = @transform_1, window_bounds = array<i64: 1, 16, 8>}, {transform_indices = @transform_2, window_bounds = array<i64: 1, 512, 8>}, {transform_indices = @transform_3, window_bounds = array<i64: 1, 1, 8, 8>}, {transform_indices = @transform_4, window_bounds = array<i64: 1, 1, 8, 8>}]} {
    %c0 = arith.constant 0 : index
    %c0_0 = arith.constant 0 : index
    %c0_1 = arith.constant 0 : index
    %0 = vector.load %arg2[%c0, %c0_0, %c0_1] : memref<1x512x16xbf16, #tpu.memory_space<vmem>>, vector<1x512x16xbf16>
    %1 = vector.shape_cast %0 : vector<1x512x16xbf16> to vector<512x16xbf16>
    %cst = arith.constant 0.000000e+00 : bf16
    %2 = vector.broadcast %cst : bf16 to vector<512x16xbf16>
    %3 = arith.maximumf %1, %2 : vector<512x16xbf16>
    %c0_2 = arith.constant 0 : index
    %c0_3 = arith.constant 0 : index
    %c0_4 = arith.constant 0 : index
    %4 = vector.load %arg3[%c0_2, %c0_3, %c0_4] : memref<1x16x8xbf16, #tpu.memory_space<vmem>>, vector<1x16x8xbf16>
    %5 = vector.shape_cast %4 : vector<1x16x8xbf16> to vector<16x8xbf16>
    %cst_5 = arith.constant dense<0.000000e+00> : vector<512x8xf32>
    %6 = tpu.matmul %3, %5, %cst_5 {dimension_numbers = #tpu.dot_dimension_numbers<[1], [0], [0], [1], [0, 0, 1, 1], [], []>} : vector<512x16xbf16>, vector<16x8xbf16>, vector<512x8xf32> -> vector<512x8xf32>
    %7 = vector.shape_cast %6 : vector<512x8xf32> to vector<1x512x8xf32>
    %c0_6 = arith.constant 0 : index
    %c0_7 = arith.constant 0 : index
    %c0_8 = arith.constant 0 : index
    %8 = vector.load %arg4[%c0_6, %c0_7, %c0_8] : memref<1x512x8xf32, #tpu.memory_space<vmem>>, vector<1x512x8xf32>
    tpu.vector_store %arg4[%c0_6, %c0_7, %c0_8], %7 {strides = array<i32>} : memref<1x512x8xf32, #tpu.memory_space<vmem>>, vector<1x512x8xf32>,
    %cst_9 = arith.constant 1.000000e+00 : f32
    %9 = vector.broadcast %cst_9 : f32 to vector<8x512xf32>
    %cst_10 = arith.constant dense<0.000000e+00> : vector<8x8xf32>
    %10 = tpu.matmul %9, %6, %cst_10 {dimension_numbers = #tpu.dot_dimension_numbers<[1], [0], [0], [1], [0, 0, 1, 1], [], []>} : vector<8x512xf32>, vector<512x8xf32>, vector<8x8xf32> -> vector<8x8xf32>
    %11 = arith.mulf %6, %6 : vector<512x8xf32>
    %cst_11 = arith.constant dense<0.000000e+00> : vector<8x8xf32>
    %12 = tpu.matmul %9, %11, %cst_11 {dimension_numbers = #tpu.dot_dimension_numbers<[1], [0], [0], [1], [0, 0, 1, 1], [], []>} : vector<8x512xf32>, vector<512x8xf32>, vector<8x8xf32> -> vector<8x8xf32>
    %13 = vector.shape_cast %10 : vector<8x8xf32> to vector<1x1x8x8xf32>
    %c0_12 = arith.constant 0 : index
    %c0_13 = arith.constant 0 : index
    %c0_14 = arith.constant 0 : index
    %c0_15 = arith.constant 0 : index
    %14 = vector.load %arg5[%c0_12, %c0_13, %c0_14, %c0_15] : memref<1x1x8x8xf32, #tpu.memory_space<vmem>>, vector<1x1x8x8xf32>
    tpu.vector_store %arg5[%c0_12, %c0_13, %c0_14, %c0_15], %13 {strides = array<i32>} : memref<1x1x8x8xf32, #tpu.memory_space<vmem>>, vector<1x1x8x8xf32>,
    %15 = vector.shape_cast %12 : vector<8x8xf32> to vector<1x1x8x8xf32>
    %c0_16 = arith.constant 0 : index
    %c0_17 = arith.constant 0 : index
    %c0_18 = arith.constant 0 : index
    %c0_19 = arith.constant 0 : index
    %16 = vector.load %arg6[%c0_16, %c0_17, %c0_18, %c0_19] : memref<1x1x8x8xf32, #tpu.memory_space<vmem>>, vector<1x1x8x8xf32>
    tpu.vector_store %arg6[%c0_16, %c0_17, %c0_18, %c0_19], %15 {strides = array<i32>} : memref<1x1x8x8xf32, #tpu.memory_space<vmem>>, vector<1x1x8x8xf32>,
    return
  }
  func.func @transform_0(%arg0: i32, %arg1: i32) -> (i32, i32, i32) {
    %c0_i32 = arith.constant 0 : i32
    %c0_i32_0 = arith.constant 0 : i32
    return %arg0, %arg1, %c0_i32 : i32, i32, i32
  }
  func.func @transform_1(%arg0: i32, %arg1: i32) -> (i32, i32, i32) {
    %c0_i32 = arith.constant 0 : i32
    %c0_i32_0 = arith.constant 0 : i32
    %c0_i32_1 = arith.constant 0 : i32
    return %arg0, %c0_i32, %c0_i32_0 : i32, i32, i32
  }
  func.func @transform_2(%arg0: i32, %arg1: i32) -> (i32, i32, i32) {
    %c0_i32 = arith.constant 0 : i32
    %c0_i32_0 = arith.constant 0 : i32
    return %arg0, %arg1, %c0_i32 : i32, i32, i32
  }
  func.func @transform_3(%arg0: i32, %arg1: i32) -> (i32, i32, i32, i32) {
    %c0_i32 = arith.constant 0 : i32
    %c0_i32_0 = arith.constant 0 : i32
    %c0_i32_1 = arith.constant 0 : i32
    return %arg0, %arg1, %c0_i32, %c0_i32_0 : i32, i32, i32, i32
  }
  func.func @transform_4(%arg0: i32, %arg1: i32) -> (i32, i32, i32, i32) {
    %c0_i32 = arith.constant 0 : i32
    %c0_i32_0 = arith.constant 0 : i32
    %c0_i32_1 = arith.constant 0 : i32
    return %arg0, %arg1, %c0_i32, %c0_i32_0 : i32, i32, i32, i32
  }
}

module attributes {stable_mosaic.version = 11 : i64} {
  func.func @bn_apply_kernel(%arg0: i32, %arg1: memref<128x128xf32, #tpu.memory_space<vmem>>, %arg2: memref<1x128xf32, #tpu.memory_space<vmem>>, %arg3: memref<1x128xf32, #tpu.memory_space<vmem>>, %arg4: memref<128x128xf32, #tpu.memory_space<vmem>>) attributes {dimension_semantics = [#tpu.dimension_semantics<parallel>], iteration_bounds = array<i64: 1>, scalar_prefetch = 0 : i64, scratch_operands = 0 : i64, tpu.core_type = #tpu.core_type<tc>, window_params = [{transform_indices = @transform_0, window_bounds = array<i64: 128, 128>}, {pipeline_mode = #tpu.pipeline_mode<synchronous>, transform_indices = @transform_1, window_bounds = array<i64: 1, 128>}, {pipeline_mode = #tpu.pipeline_mode<synchronous>, transform_indices = @transform_2, window_bounds = array<i64: 1, 128>}, {transform_indices = @transform_3, window_bounds = array<i64: 128, 128>}]} {
    %c0 = arith.constant 0 : index
    %c0_0 = arith.constant 0 : index
    %0 = vector.load %arg1[%c0, %c0_0] : memref<128x128xf32, #tpu.memory_space<vmem>>, vector<128x128xf32>
    %c0_1 = arith.constant 0 : index
    %c0_2 = arith.constant 0 : index
    %1 = vector.load %arg2[%c0_1, %c0_2] : memref<1x128xf32, #tpu.memory_space<vmem>>, vector<1x128xf32>
    %2 = vector.broadcast %1 : vector<1x128xf32> to vector<128x128xf32>
    %3 = arith.mulf %0, %2 : vector<128x128xf32>
    %c0_3 = arith.constant 0 : index
    %c0_4 = arith.constant 0 : index
    %4 = vector.load %arg3[%c0_3, %c0_4] : memref<1x128xf32, #tpu.memory_space<vmem>>, vector<1x128xf32>
    %5 = vector.broadcast %4 : vector<1x128xf32> to vector<128x128xf32>
    %6 = arith.addf %3, %5 : vector<128x128xf32>
    %c0_5 = arith.constant 0 : index
    %c0_6 = arith.constant 0 : index
    %7 = vector.load %arg4[%c0_5, %c0_6] : memref<128x128xf32, #tpu.memory_space<vmem>>, vector<128x128xf32>
    tpu.vector_store %arg4[%c0_5, %c0_6], %6 {strides = array<i32>} : memref<128x128xf32, #tpu.memory_space<vmem>>, vector<128x128xf32>,
    return
  }
  func.func @transform_0(%arg0: i32) -> (i32, i32) {
    %c0_i32 = arith.constant 0 : i32
    %c0_i32_0 = arith.constant 0 : i32
    return %arg0, %c0_i32 : i32, i32
  }
  func.func @transform_1(%arg0: i32) -> (i32, i32) {
    %c0_i32 = arith.constant 0 : i32
    %c0_i32_0 = arith.constant 0 : i32
    %c0_i32_1 = arith.constant 0 : i32
    return %c0_i32, %c0_i32_0 : i32, i32
  }
  func.func @transform_2(%arg0: i32) -> (i32, i32) {
    %c0_i32 = arith.constant 0 : i32
    %c0_i32_0 = arith.constant 0 : i32
    %c0_i32_1 = arith.constant 0 : i32
    return %c0_i32, %c0_i32_0 : i32, i32
  }
  func.func @transform_3(%arg0: i32) -> (i32, i32) {
    %c0_i32 = arith.constant 0 : i32
    %c0_i32_0 = arith.constant 0 : i32
    return %arg0, %c0_i32 : i32, i32
  }
}

</mosaic_0001>

<llo_original>
// kernel: reverse.2
$region0: #{reverse.2}
  %s0 = inlined_call_operand.vmem [shape: bf16[4,8,2,2], index: 0, kind: input, shape index: {}]
  %s1 = inlined_call_operand.vmem [shape: bf16[4,8,2,2], index: 1, kind: output, shape index: {}]
  $region1: #{reverse.2} parent=0
    #allocation0 [shape = 'u8[65536]{0}', space=vmem, size = 0x10000, scoped, tag = 'operand span for operand 0']
    #allocation1 [shape = 'u8[8192]{0}', space=vmem, size = 0x2000, scoped, tag = 'packed  for operand 0']
    #allocation2 [shape = 'u8[32768]{0}', space=vmem, size = 0x8000, scoped, tag = 'operand span for operand 1']
    #allocation3 [shape = 'u8[4096]{0}', space=vmem, size = 0x1000, scoped, tag = 'packed  for operand 1']
    %s2 = scalar_lea.vmem [#allocation1], 1
    // Predicated region
    $region2: #{reverse.2} parent=1 // pred_check
      _
    $region3: #{reverse.2} parent=1 // pred_check_branch
      %4 = sbr.rel (0) target = $region5
    $region4: #{reverse.2} parent=1 // pred_region
      // Predicated region
      $region6: #{reverse.2} parent=4 // pred_check
        _
      $region7: #{reverse.2} parent=4 // pred_check_branch
        %6 = sbr.rel target = $region9
      $region8: #{reverse.2} parent=4 // pred_region
        // Predicated region
        $region21: #{reverse.2} parent=8 // pred_check
          _
        $region22: #{reverse.2} parent=8 // pred_check_branch
          %36 = sbr.rel (0) target = $region24
        $region23: #{reverse.2} parent=8 // pred_region
          loop: start=0, step=1, limit=1
          $region25: #{reverse.2} parent=23 // loop_pre_header
            _
          $region26: #{reverse.2} parent=23 // loop_header
            %s38 = sphi 0, %s42
            %p39 = scmp.ge.s32.totalorder %s38, 1
            %s43 = sphi %s0, %s0
            %s44 = sphi %s2, %s2
          $region27: #{reverse.2} parent=23 // loop_header_branch
            %41 = sbr.rel (%p39) target = $region31
          $region28: #{reverse.2} parent=23 // loop_body
            _
          $region29: #{reverse.2} parent=23 // loop_footer
            %s42 = sadd.s32 1, %s38
          $region30: #{reverse.2} parent=23 // loop_footer_branch
            %37 = sbr.rel target = $region26
          $region31: #{reverse.2} parent=23 // loop_exit
            _
          %s46 = ssub.s32 2, 1
          loop: start=0, step=1, limit=1
          $region32: #{reverse.2} parent=23 // loop_pre_header
            _
          $region33: #{reverse.2} parent=23 // loop_header
            %s48 = sphi 0, %s52
            %p49 = scmp.ge.s32.totalorder %s48, 1
            %s53 = sphi %s0, %s0
            %s54 = sphi %s2, %s2
          $region34: #{reverse.2} parent=23 // loop_header_branch
            %51 = sbr.rel (%p49) target = $region38
          $region35: #{reverse.2} parent=23 // loop_body
            %v55 = vld [vmem:[%s53] sm:%s46]
            %56 = vst [vmem:[%s54] sm:%s46] %v55
            %v57 = vld [vmem:[%s53 + $0x1] sm:%s46]
            %58 = vst [vmem:[%s54 + $0x2] sm:%s46] %v57
            %v59 = vld [vmem:[%s53 + $0x2] sm:%s46]
            %60 = vst [vmem:[%s54 + $0x4] sm:%s46] %v59
            %v61 = vld [vmem:[%s53 + $0x3] sm:%s46]
            %62 = vst [vmem:[%s54 + $0x6] sm:%s46] %v61
            %v63 = vld [vmem:[%s53 + $0x4] sm:%s46]
            %64 = vst [vmem:[%s54 + $0x8] sm:%s46] %v63
            %v65 = vld [vmem:[%s53 + $0x5] sm:%s46]
            %66 = vst [vmem:[%s54 + $0xa] sm:%s46] %v65
            %v67 = vld [vmem:[%s53 + $0x6] sm:%s46]
            %68 = vst [vmem:[%s54 + $0xc] sm:%s46] %v67
            %v69 = vld [vmem:[%s53 + $0x7] sm:%s46]
            %70 = vst [vmem:[%s54 + $0xe] sm:%s46] %v69
          $region36: #{reverse.2} parent=23 // loop_footer
            %s52 = sadd.s32 1, %s48
          $region37: #{reverse.2} parent=23 // loop_footer_branch
            %47 = sbr.rel target = $region33
          $region38: #{reverse.2} parent=23 // loop_exit
            _
        $region24: #{reverse.2} parent=8 // pred_fallthru
          _
      $region9: #{reverse.2} parent=4 // pred_fallthru
        _
      // Predicated region
      $region10: #{reverse.2} parent=4 // pred_check
        _
      $region11: #{reverse.2} parent=4 // pred_check_branch
        %8 = sbr.rel (0) target = $region13
      $region12: #{reverse.2} parent=4 // pred_region
        %s10 = ssub.s32 2, 1
        loop: start=0, step=1, limit=1
        $region14: #{reverse.2} parent=12 // loop_pre_header
          _
        $region15: #{reverse.2} parent=12 // loop_header
          %s12 = sphi 0, %s16
          %p13 = scmp.ge.s32.totalorder %s12, 1
          %s17 = sphi %s0, %s0
          %s18 = sphi %s2, %s2
        $region16: #{reverse.2} parent=12 // loop_header_branch
          %15 = sbr.rel (%p13) target = $region20
        $region17: #{reverse.2} parent=12 // loop_body
          %v19 = vld [vmem:[%s17] sm:%s10]
          %20 = vst [vmem:[%s18] sm:%s10] %v19
          %v21 = vld [vmem:[%s17 + $0x1] sm:%s10]
          %22 = vst [vmem:[%s18 + $0x2] sm:%s10] %v21
          %v23 = vld [vmem:[%s17 + $0x2] sm:%s10]
          %24 = vst [vmem:[%s18 + $0x4] sm:%s10] %v23
          %v25 = vld [vmem:[%s17 + $0x3] sm:%s10]
          %26 = vst [vmem:[%s18 + $0x6] sm:%s10] %v25
          %v27 = vld [vmem:[%s17 + $0x4] sm:%s10]
          %28 = vst [vmem:[%s18 + $0x8] sm:%s10] %v27
          %v29 = vld [vmem:[%s17 + $0x5] sm:%s10]
          %30 = vst [vmem:[%s18 + $0xa] sm:%s10] %v29
          %v31 = vld [vmem:[%s17 + $0x6] sm:%s10]
          %32 = vst [vmem:[%s18 + $0xc] sm:%s10] %v31
          %v33 = vld [vmem:[%s17 + $0x7] sm:%s10]
          %34 = vst [vmem:[%s18 + $0xe] sm:%s10] %v33
        $region18: #{reverse.2} parent=12 // loop_footer
          %s16 = sadd.s32 1, %s12
        $region19: #{reverse.2} parent=12 // loop_footer_branch
          %11 = sbr.rel target = $region15
        $region20: #{reverse.2} parent=12 // loop_exit
          _
      $region13: #{reverse.2} parent=4 // pred_fallthru
        _
    $region5: #{reverse.2} parent=1 // pred_fallthru
      _
    %71 = vnop
    %s73 = smul.u32 1, 2
    %s74 = sshll.u32 1, %s73
    %s75 = ssub.s32 %s74, 1
    %s76 = smul.addr 1, 15
    %s77 = scalar_lea.vmem [#allocation1], %s76
    %s78 = sshrl.u32 %s75, 1
    %s79 = sor.u32 %s75, %s78
    %s80 = sand.u32 %s79, 85
    %s81 = sshrl.u32 %s80, 1
    %s82 = sor.u32 %s80, %s81
    %s83 = sand.u32 51, %s82
    %s84 = sshrl.u32 %s83, 2
    %s85 = sor.u32 %s83, %s84
    %s86 = sand.u32 15, %s85
    %v87 = vld [vmem:[%s77] sm:%s86]
    %v88 = vunpack.c.l.bf16 %v87
    %v89 = vunpack.c.h.bf16 %v87
    %s90 = scalar_lea.vmem [#allocation0], 120
    %91 = vst [vmem:[%s90] sm:%s75] %v88
    %s92 = smul.addr 1, 14
    %s93 = scalar_lea.vmem [#allocation1], %s92
    %s94 = sshrl.u32 %s75, 1
    %s95 = sor.u32 %s75, %s94
    %s96 = sand.u32 %s95, 85
    %s97 = sshrl.u32 %s96, 1
    %s98 = sor.u32 %s96, %s97
    %s99 = sand.u32 51, %s98
    %s100 = sshrl.u32 %s99, 2
    %s101 = sor.u32 %s99, %s100
    %s102 = sand.u32 15, %s101
    %v103 = vld [vmem:[%s93] sm:%s102]
    %v104 = vunpack.c.l.bf16 %v103
    %v105 = vunpack.c.h.bf16 %v103
    %s106 = scalar_lea.vmem [#allocation0], 112
    %107 = vst [vmem:[%s106] sm:%s75] %v104
    %s108 = smul.addr 1, 13
    %s109 = scalar_lea.vmem [#allocation1], %s108
    %s110 = sshrl.u32 %s75, 1
    %s111 = sor.u32 %s75, %s110
    %s112 = sand.u32 %s111, 85
    %s113 = sshrl.u32 %s112, 1
    %s114 = sor.u32 %s112, %s113
    %s115 = sand.u32 51, %s114
    %s116 = sshrl.u32 %s115, 2
    %s117 = sor.u32 %s115, %s116
    %s118 = sand.u32 15, %s117
    %v119 = vld [vmem:[%s109] sm:%s118]
    %v120 = vunpack.c.l.bf16 %v119
    %v121 = vunpack.c.h.bf16 %v119
    %s122 = scalar_lea.vmem [#allocation0], 104
    %123 = vst [vmem:[%s122] sm:%s75] %v120
    %s124 = smul.addr 1, 12
    %s125 = scalar_lea.vmem [#allocation1], %s124
    %s126 = sshrl.u32 %s75, 1
    %s127 = sor.u32 %s75, %s126
    %s128 = sand.u32 %s127, 85
    %s129 = sshrl.u32 %s128, 1
    %s130 = sor.u32 %s128, %s129
    %s131 = sand.u32 51, %s130
    %s132 = sshrl.u32 %s131, 2
    %s133 = sor.u32 %s131, %s132
    %s134 = sand.u32 15, %s133
    %v135 = vld [vmem:[%s125] sm:%s134]
    %v136 = vunpack.c.l.bf16 %v135
    %v137 = vunpack.c.h.bf16 %v135
    %s138 = scalar_lea.vmem [#allocation0], 96
    %139 = vst [vmem:[%s138] sm:%s75] %v136
    %s140 = smul.addr 1, 11
    %s141 = scalar_lea.vmem [#allocation1], %s140
    %s142 = sshrl.u32 %s75, 1
    %s143 = sor.u32 %s75, %s142
    %s144 = sand.u32 %s143, 85
    %s145 = sshrl.u32 %s144, 1
    %s146 = sor.u32 %s144, %s145
    %s147 = sand.u32 51, %s146
    %s148 = sshrl.u32 %s147, 2
    %s149 = sor.u32 %s147, %s148
    %s150 = sand.u32 15, %s149
    %v151 = vld [vmem:[%s141] sm:%s150]
    %v152 = vunpack.c.l.bf16 %v151
    %v153 = vunpack.c.h.bf16 %v151
    %s154 = scalar_lea.vmem [#allocation0], 88
    %155 = vst [vmem:[%s154] sm:%s75] %v152
    %s156 = smul.addr 1, 10
    %s157 = scalar_lea.vmem [#allocation1], %s156
    %s158 = sshrl.u32 %s75, 1
    %s159 = sor.u32 %s75, %s158
    %s160 = sand.u32 %s159, 85
    %s161 = sshrl.u32 %s160, 1
    %s162 = sor.u32 %s160, %s161
    %s163 = sand.u32 51, %s162
    %s164 = sshrl.u32 %s163, 2
    %s165 = sor.u32 %s163, %s164
    %s166 = sand.u32 15, %s165
    %v167 = vld [vmem:[%s157] sm:%s166]
    %v168 = vunpack.c.l.bf16 %v167
    %v169 = vunpack.c.h.bf16 %v167
    %s170 = scalar_lea.vmem [#allocation0], 80
    %171 = vst [vmem:[%s170] sm:%s75] %v168
    %s172 = smul.addr 1, 9
    %s173 = scalar_lea.vmem [#allocation1], %s172
    %s174 = sshrl.u32 %s75, 1
    %s175 = sor.u32 %s75, %s174
    %s176 = sand.u32 %s175, 85
    %s177 = sshrl.u32 %s176, 1
    %s178 = sor.u32 %s176, %s177
    %s179 = sand.u32 51, %s178
    %s180 = sshrl.u32 %s179, 2
    %s181 = sor.u32 %s179, %s180
    %s182 = sand.u32 15, %s181
    %v183 = vld [vmem:[%s173] sm:%s182]
    %v184 = vunpack.c.l.bf16 %v183
    %v185 = vunpack.c.h.bf16 %v183
    %s186 = scalar_lea.vmem [#allocation0], 72
    %187 = vst [vmem:[%s186] sm:%s75] %v184
    %s188 = smul.addr 1, 8
    %s189 = scalar_lea.vmem [#allocation1], %s188
    %s190 = sshrl.u32 %s75, 1
    %s191 = sor.u32 %s75, %s190
    %s192 = sand.u32 %s191, 85
    %s193 = sshrl.u32 %s192, 1
    %s194 = sor.u32 %s192, %s193
    %s195 = sand.u32 51, %s194
    %s196 = sshrl.u32 %s195, 2
    %s197 = sor.u32 %s195, %s196
    %s198 = sand.u32 15, %s197
    %v199 = vld [vmem:[%s189] sm:%s198]
    %v200 = vunpack.c.l.bf16 %v199
    %v201 = vunpack.c.h.bf16 %v199
    %s202 = scalar_lea.vmem [#allocation0], 64
    %203 = vst [vmem:[%s202] sm:%s75] %v200
    %s204 = smul.addr 1, 7
    %s205 = scalar_lea.vmem [#allocation1], %s204
    %s206 = sshrl.u32 %s75, 1
    %s207 = sor.u32 %s75, %s206
    %s208 = sand.u32 %s207, 85
    %s209 = sshrl.u32 %s208, 1
    %s210 = sor.u32 %s208, %s209
    %s211 = sand.u32 51, %s210
    %s212 = sshrl.u32 %s211, 2
    %s213 = sor.u32 %s211, %s212
    %s214 = sand.u32 15, %s213
    %v215 = vld [vmem:[%s205] sm:%s214]
    %v216 = vunpack.c.l.bf16 %v215
    %v217 = vunpack.c.h.bf16 %v215
    %s218 = scalar_lea.vmem [#allocation0], 56
    %219 = vst [vmem:[%s218] sm:%s75] %v216
    %s220 = smul.addr 1, 6
    %s221 = scalar_lea.vmem [#allocation1], %s220
    %s222 = sshrl.u32 %s75, 1
    %s223 = sor.u32 %s75, %s222
    %s224 = sand.u32 %s223, 85
    %s225 = sshrl.u32 %s224, 1
    %s226 = sor.u32 %s224, %s225
    %s227 = sand.u32 51, %s226
    %s228 = sshrl.u32 %s227, 2
    %s229 = sor.u32 %s227, %s228
    %s230 = sand.u32 15, %s229
    %v231 = vld [vmem:[%s221] sm:%s230]
    %v232 = vunpack.c.l.bf16 %v231
    %v233 = vunpack.c.h.bf16 %v231
    %s234 = scalar_lea.vmem [#allocation0], 48
    %235 = vst [vmem:[%s234] sm:%s75] %v232
    %s236 = smul.addr 1, 5
    %s237 = scalar_lea.vmem [#allocation1], %s236
    %s238 = sshrl.u32 %s75, 1
    %s239 = sor.u32 %s75, %s238
    %s240 = sand.u32 %s239, 85
    %s241 = sshrl.u32 %s240, 1
    %s242 = sor.u32 %s240, %s241
    %s243 = sand.u32 51, %s242
    %s244 = sshrl.u32 %s243, 2
    %s245 = sor.u32 %s243, %s244
    %s246 = sand.u32 15, %s245
    %v247 = vld [vmem:[%s237] sm:%s246]
    %v248 = vunpack.c.l.bf16 %v247
    %v249 = vunpack.c.h.bf16 %v247
    %s250 = scalar_lea.vmem [#allocation0], 40
    %251 = vst [vmem:[%s250] sm:%s75] %v248
    %s252 = smul.addr 1, 4
    %s253 = scalar_lea.vmem [#allocation1], %s252
    %s254 = sshrl.u32 %s75, 1
    %s255 = sor.u32 %s75, %s254
    %s256 = sand.u32 %s255, 85
    %s257 = sshrl.u32 %s256, 1
    %s258 = sor.u32 %s256, %s257
    %s259 = sand.u32 51, %s258
    %s260 = sshrl.u32 %s259, 2
    %s261 = sor.u32 %s259, %s260
    %s262 = sand.u32 15, %s261
    %v263 = vld [vmem:[%s253] sm:%s262]
    %v264 = vunpack.c.l.bf16 %v263
    %v265 = vunpack.c.h.bf16 %v263
    %s266 = scalar_lea.vmem [#allocation0], 32
    %267 = vst [vmem:[%s266] sm:%s75] %v264
    %s268 = smul.addr 1, 3
    %s269 = scalar_lea.vmem [#allocation1], %s268
    %s270 = sshrl.u32 %s75, 1
    %s271 = sor.u32 %s75, %s270
    %s272 = sand.u32 %s271, 85
    %s273 = sshrl.u32 %s272, 1
    %s274 = sor.u32 %s272, %s273
    %s275 = sand.u32 51, %s274
    %s276 = sshrl.u32 %s275, 2
    %s277 = sor.u32 %s275, %s276
    %s278 = sand.u32 15, %s277
    %v279 = vld [vmem:[%s269] sm:%s278]
    %v280 = vunpack.c.l.bf16 %v279
    %v281 = vunpack.c.h.bf16 %v279
    %s282 = scalar_lea.vmem [#allocation0], 24
    %283 = vst [vmem:[%s282] sm:%s75] %v280
    %s284 = smul.addr 1, 2
    %s285 = scalar_lea.vmem [#allocation1], %s284
    %s286 = sshrl.u32 %s75, 1
    %s287 = sor.u32 %s75, %s286
    %s288 = sand.u32 %s287, 85
    %s289 = sshrl.u32 %s288, 1
    %s290 = sor.u32 %s288, %s289
    %s291 = sand.u32 51, %s290
    %s292 = sshrl.u32 %s291, 2
    %s293 = sor.u32 %s291, %s292
    %s294 = sand.u32 15, %s293
    %v295 = vld [vmem:[%s285] sm:%s294]
    %v296 = vunpack.c.l.bf16 %v295
    %v297 = vunpack.c.h.bf16 %v295
    %s298 = scalar_lea.vmem [#allocation0], 16
    %299 = vst [vmem:[%s298] sm:%s75] %v296
    %s300 = scalar_lea.vmem [#allocation1], 1
    %s301 = sshrl.u32 %s75, 1
    %s302 = sor.u32 %s75, %s301
    %s303 = sand.u32 %s302, 85
    %s304 = sshrl.u32 %s303, 1
    %s305 = sor.u32 %s303, %s304
    %s306 = sand.u32 51, %s305
    %s307 = sshrl.u32 %s306, 2
    %s308 = sor.u32 %s306, %s307
    %s309 = sand.u32 15, %s308
    %v310 = vld [vmem:[%s300] sm:%s309]
    %v311 = vunpack.c.l.bf16 %v310
    %v312 = vunpack.c.h.bf16 %v310
    %s313 = scalar_lea.vmem [#allocation0], 8
    %314 = vst [vmem:[%s313] sm:%s75] %v311
    %s315 = sshrl.u32 %s75, 1
    %s316 = sor.u32 %s75, %s315
    %s317 = sand.u32 %s316, 85
    %s318 = sshrl.u32 %s317, 1
    %s319 = sor.u32 %s317, %s318
    %s320 = sand.u32 51, %s319
    %s321 = sshrl.u32 %s320, 2
    %s322 = sor.u32 %s320, %s321
    %s323 = sand.u32 15, %s322
    %v324 = vld [vmem:[#allocation1] sm:%s323]
    %v325 = vunpack.c.l.bf16 %v324
    %v326 = vunpack.c.h.bf16 %v324
    %327 = vst [vmem:[#allocation0] sm:%s75] %v325
    %s328 = scalar_lea.vmem [#allocation0], 16
    %s329 = scalar_lea.vmem %s328, 7 [#allocation0]
    %v330 = vld [vmem:[%s329] ss:$-1 sm:$0xff]
    %v331 = vrot.slane %v330, 6
    %332 = vst [vmem:[#allocation2] sm:$0xff] %v331
    %s333 = scalar_lea.vmem %s328, 8 [#allocation0]
    %s334 = scalar_lea.vmem %s333, 7 [#allocation0]
    %v335 = vld [vmem:[%s334] ss:$-1 sm:$0xff]
    %v336 = vrot.slane %v335, 6
    %v337 = vlaneseq
    %v338 = vshrl.u32 %v337, 7
    %vm339 = vcmp.lt.s32.totalorder %v338, 2
    %340 = vst.msk [vmem:[#allocation2] sm:$0xff] %vm339, %v336
    %s341 = scalar_lea.vmem [#allocation2], 8
    %s342 = scalar_lea.vmem [#allocation0], 7
    %v343 = vld [vmem:[%s342] ss:$-1 sm:$0xff]
    %v344 = vrot.slane %v343, 6
    %345 = vst [vmem:[%s341] sm:$0xff] %v344
    %s346 = scalar_lea.vmem [#allocation0], 8
    %s347 = scalar_lea.vmem %s346, 7 [#allocation0]
    %v348 = vld [vmem:[%s347] ss:$-1 sm:$0xff]
    %v349 = vrot.slane %v348, 6
    %v350 = vlaneseq
    %v351 = vshrl.u32 %v350, 7
    %vm352 = vcmp.lt.s32.totalorder %v351, 2
    %353 = vst.msk [vmem:[%s341] sm:$0xff] %vm352, %v349
    %s354 = scalar_lea.vmem [#allocation2], 16
    %s355 = scalar_lea.vmem [#allocation0], 48
    %s356 = scalar_lea.vmem %s355, 7 [#allocation0]
    %v357 = vld [vmem:[%s356] ss:$-1 sm:$0xff]
    %v358 = vrot.slane %v357, 6
    %359 = vst [vmem:[%s354] sm:$0xff] %v358
    %s360 = scalar_lea.vmem %s355, 8 [#allocation0]
    %s361 = scalar_lea.vmem %s360, 7 [#allocation0]
    %v362 = vld [vmem:[%s361] ss:$-1 sm:$0xff]
    %v363 = vrot.slane %v362, 6
    %v364 = vlaneseq
    %v365 = vshrl.u32 %v364, 7
    %vm366 = vcmp.lt.s32.totalorder %v365, 2
    %367 = vst.msk [vmem:[%s354] sm:$0xff] %vm366, %v363
    %s368 = scalar_lea.vmem [#allocation2], 24
    %s369 = scalar_lea.vmem [#allocation0], 32
    %s370 = scalar_lea.vmem %s369, 7 [#allocation0]
    %v371 = vld [vmem:[%s370] ss:$-1 sm:$0xff]
    %v372 = vrot.slane %v371, 6
    %373 = vst [vmem:[%s368] sm:$0xff] %v372
    %s374 = scalar_lea.vmem %s369, 8 [#allocation0]
    %s375 = scalar_lea.vmem %s374, 7 [#allocation0]
    %v376 = vld [vmem:[%s375] ss:$-1 sm:$0xff]
    %v377 = vrot.slane %v376, 6
    %v378 = vlaneseq
    %v379 = vshrl.u32 %v378, 7
    %vm380 = vcmp.lt.s32.totalorder %v379, 2
    %381 = vst.msk [vmem:[%s368] sm:$0xff] %vm380, %v377
    %s382 = scalar_lea.vmem [#allocation2], 32
    %s383 = scalar_lea.vmem [#allocation0], 80
    %s384 = scalar_lea.vmem %s383, 7 [#allocation0]
    %v385 = vld [vmem:[%s384] ss:$-1 sm:$0xff]
    %v386 = vrot.slane %v385, 6
    %387 = vst [vmem:[%s382] sm:$0xff] %v386
    %s388 = scalar_lea.vmem %s383, 8 [#allocation0]
    %s389 = scalar_lea.vmem %s388, 7 [#allocation0]
    %v390 = vld [vmem:[%s389] ss:$-1 sm:$0xff]
    %v391 = vrot.slane %v390, 6
    %v392 = vlaneseq
    %v393 = vshrl.u32 %v392, 7
    %vm394 = vcmp.lt.s32.totalorder %v393, 2
    %395 = vst.msk [vmem:[%s382] sm:$0xff] %vm394, %v391
    %s396 = scalar_lea.vmem [#allocation2], 40
    %s397 = scalar_lea.vmem [#allocation0], 64
    %s398 = scalar_lea.vmem %s397, 7 [#allocation0]
    %v399 = vld [vmem:[%s398] ss:$-1 sm:$0xff]
    %v400 = vrot.slane %v399, 6
    %401 = vst [vmem:[%s396] sm:$0xff] %v400
    %s402 = scalar_lea.vmem %s397, 8 [#allocation0]
    %s403 = scalar_lea.vmem %s402, 7 [#allocation0]
    %v404 = vld [vmem:[%s403] ss:$-1 sm:$0xff]
    %v405 = vrot.slane %v404, 6
    %v406 = vlaneseq
    %v407 = vshrl.u32 %v406, 7
    %vm408 = vcmp.lt.s32.totalorder %v407, 2
    %409 = vst.msk [vmem:[%s396] sm:$0xff] %vm408, %v405
    %s410 = scalar_lea.vmem [#allocation2], 48
    %s411 = scalar_lea.vmem [#allocation0], 112
    %s412 = scalar_lea.vmem %s411, 7 [#allocation0]
    %v413 = vld [vmem:[%s412] ss:$-1 sm:$0xff]
    %v414 = vrot.slane %v413, 6
    %415 = vst [vmem:[%s410] sm:$0xff] %v414
    %s416 = scalar_lea.vmem %s411, 8 [#allocation0]
    %s417 = scalar_lea.vmem %s416, 7 [#allocation0]
    %v418 = vld [vmem:[%s417] ss:$-1 sm:$0xff]
    %v419 = vrot.slane %v418, 6
    %v420 = vlaneseq
    %v421 = vshrl.u32 %v420, 7
    %vm422 = vcmp.lt.s32.totalorder %v421, 2
    %423 = vst.msk [vmem:[%s410] sm:$0xff] %vm422, %v419
    %s424 = scalar_lea.vmem [#allocation2], 56
    %s425 = scalar_lea.vmem [#allocation0], 96
    %s426 = scalar_lea.vmem %s425, 7 [#allocation0]
    %v427 = vld [vmem:[%s426] ss:$-1 sm:$0xff]
    %v428 = vrot.slane %v427, 6
    %429 = vst [vmem:[%s424] sm:$0xff] %v428
    %s430 = scalar_lea.vmem %s425, 8 [#allocation0]
    %s431 = scalar_lea.vmem %s430, 7 [#allocation0]
    %v432 = vld [vmem:[%s431] ss:$-1 sm:$0xff]
    %v433 = vrot.slane %v432, 6
    %v434 = vlaneseq
    %v435 = vshrl.u32 %v434, 7
    %vm436 = vcmp.lt.s32.totalorder %v435, 2
    %437 = vst.msk [vmem:[%s424] sm:$0xff] %vm436, %v433
    %s439 = smul.u32 1, 2
    %s440 = sshll.u32 1, %s439
    %s441 = ssub.s32 %s440, 1
    %s442 = sshrl.u32 %s439, 1
    %v443 = vld [vmem:[#allocation2] sm:%s441]
    %v444 = vpack.c.bf16 0.0, %v443
    %s445 = sshll.u32 1, %s442
    %s446 = ssub.s32 %s445, 1
    %447 = vst [vmem:[#allocation3] sm:%s446] %v444
    %s448 = scalar_lea.vmem [#allocation2], 8
    %v449 = vld [vmem:[%s448] sm:%s441]
    %v450 = vpack.c.bf16 0.0, %v449
    %s451 = sshll.u32 1, %s442
    %s452 = ssub.s32 %s451, 1
    %s453 = scalar_lea.vmem [#allocation3], 1
    %454 = vst [vmem:[%s453] sm:%s452] %v450
    %s455 = scalar_lea.vmem [#allocation2], 16
    %v456 = vld [vmem:[%s455] sm:%s441]
    %v457 = vpack.c.bf16 0.0, %v456
    %s458 = sshll.u32 1, %s442
    %s459 = ssub.s32 %s458, 1
    %s460 = smul.addr 1, 2
    %s461 = scalar_lea.vmem [#allocation3], %s460
    %462 = vst [vmem:[%s461] sm:%s459] %v457
    %s463 = scalar_lea.vmem [#allocation2], 24
    %v464 = vld [vmem:[%s463] sm:%s441]
    %v465 = vpack.c.bf16 0.0, %v464
    %s466 = sshll.u32 1, %s442
    %s467 = ssub.s32 %s466, 1
    %s468 = smul.addr 1, 3
    %s469 = scalar_lea.vmem [#allocation3], %s468
    %470 = vst [vmem:[%s469] sm:%s467] %v465
    %s471 = scalar_lea.vmem [#allocation2], 32
    %v472 = vld [vmem:[%s471] sm:%s441]
    %v473 = vpack.c.bf16 0.0, %v472
    %s474 = sshll.u32 1, %s442
    %s475 = ssub.s32 %s474, 1
    %s476 = smul.addr 1, 4
    %s477 = scalar_lea.vmem [#allocation3], %s476
    %478 = vst [vmem:[%s477] sm:%s475] %v473
    %s479 = scalar_lea.vmem [#allocation2], 40
    %v480 = vld [vmem:[%s479] sm:%s441]
    %v481 = vpack.c.bf16 0.0, %v480
    %s482 = sshll.u32 1, %s442
    %s483 = ssub.s32 %s482, 1
    %s484 = smul.addr 1, 5
    %s485 = scalar_lea.vmem [#allocation3], %s484
    %486 = vst [vmem:[%s485] sm:%s483] %v481
    %s487 = scalar_lea.vmem [#allocation2], 48
    %v488 = vld [vmem:[%s487] sm:%s441]
    %v489 = vpack.c.bf16 0.0, %v488
    %s490 = sshll.u32 1, %s442
    %s491 = ssub.s32 %s490, 1
    %s492 = smul.addr 1, 6
    %s493 = scalar_lea.vmem [#allocation3], %s492
    %494 = vst [vmem:[%s493] sm:%s491] %v489
    %s495 = scalar_lea.vmem [#allocation2], 56
    %v496 = vld [vmem:[%s495] sm:%s441]
    %v497 = vpack.c.bf16 0.0, %v496
    %s498 = sshll.u32 1, %s442
    %s499 = ssub.s32 %s498, 1
    %s500 = smul.addr 1, 7
    %s501 = scalar_lea.vmem [#allocation3], %s500
    %502 = vst [vmem:[%s501] sm:%s499] %v497
    // Predicated region
    $region39: #{reverse.2} parent=1 // pred_check
      _
    $region40: #{reverse.2} parent=1 // pred_check_branch
      %504 = sbr.rel (0) target = $region42
    $region41: #{reverse.2} parent=1 // pred_region
      // Predicated region
      $region43: #{reverse.2} parent=41 // pred_check
        _
      $region44: #{reverse.2} parent=41 // pred_check_branch
        %506 = sbr.rel (0) target = $region46
      $region45: #{reverse.2} parent=41 // pred_region
        // Predicated region
        $region58: #{reverse.2} parent=45 // pred_check
          _
        $region59: #{reverse.2} parent=45 // pred_check_branch
          %522 = sbr.rel (0) target = $region61
        $region60: #{reverse.2} parent=45 // pred_region
          loop: start=0, step=1, limit=1
          $region62: #{reverse.2} parent=60 // loop_pre_header
            _
          $region63: #{reverse.2} parent=60 // loop_header
            %s524 = sphi 0, %s528
            %p525 = scmp.ge.s32.totalorder %s524, 1
            %s529 = sphi [#allocation3], [#allocation3]
            %s530 = sphi %s1, %s1
          $region64: #{reverse.2} parent=60 // loop_header_branch
            %527 = sbr.rel (%p525) target = $region68
          $region65: #{reverse.2} parent=60 // loop_body
            %v531 = vld [vmem:[%s529] sm:$0xff]
            %532 = vst [vmem:[%s530] sm:$0xff] %v531
          $region66: #{reverse.2} parent=60 // loop_footer
            %s528 = sadd.s32 1, %s524
          $region67: #{reverse.2} parent=60 // loop_footer_branch
            %523 = sbr.rel target = $region63
          $region68: #{reverse.2} parent=60 // loop_exit
            _
        $region61: #{reverse.2} parent=45 // pred_fallthru
          _
        // Predicated region
        $region69: #{reverse.2} parent=45 // pred_check
          _
        $region70: #{reverse.2} parent=45 // pred_check_branch
          %534 = sbr.rel target = $region72
        $region71: #{reverse.2} parent=45 // pred_region
          _
        $region72: #{reverse.2} parent=45 // pred_fallthru
          _
      $region46: #{reverse.2} parent=41 // pred_fallthru
        _
      // Predicated region
      $region47: #{reverse.2} parent=41 // pred_check
        _
      $region48: #{reverse.2} parent=41 // pred_check_branch
        %508 = sbr.rel target = $region50
      $region49: #{reverse.2} parent=41 // pred_region
        %s510 = ssub.s32 256, 1
        loop: start=0, step=1, limit=1
        $region51: #{reverse.2} parent=49 // loop_pre_header
          _
        $region52: #{reverse.2} parent=49 // loop_header
          %s512 = sphi 0, %s516
          %p513 = scmp.ge.s32.totalorder %s512, 1
          %s517 = sphi [#allocation3], [#allocation3]
          %s518 = sphi %s1, %s1
        $region53: #{reverse.2} parent=49 // loop_header_branch
          %515 = sbr.rel (%p513) target = $region57
        $region54: #{reverse.2} parent=49 // loop_body
          %v519 = vld [vmem:[%s517] sm:%s510]
          %520 = vst [vmem:[%s518] sm:%s510] %v519
        $region55: #{reverse.2} parent=49 // loop_footer
          %s516 = sadd.s32 1, %s512
        $region56: #{reverse.2} parent=49 // loop_footer_branch
          %511 = sbr.rel target = $region52
        $region57: #{reverse.2} parent=49 // loop_exit
          _
      $region50: #{reverse.2} parent=41 // pred_fallthru
        _
    $region42: #{reverse.2} parent=1 // pred_fallthru
      _
    %535 = vnop

// kernel: tile.18
$region0: #{tile.18}
  #allocation0 [shape = 's32[1]{0}', space=sflag, size = 0x4, scoped, tag = 'scoped memory for tile.18']
  %s0 = inlined_call_operand.vmem [shape: f32[8], index: 0, kind: input, shape index: {}]
  %s1 = inlined_call_operand.vmem [shape: f32[16,8], index: 1, kind: output, shape index: {}]
  // Predicated region
  $region2: #{tile.18} parent=0 // pred_check
    _
  $region3: #{tile.18} parent=0 // pred_check_branch
    %3 = sbr.rel (0) target = $region5
  $region4: #{tile.18} parent=0 // pred_region
    _
  $region5: #{tile.18} parent=0 // pred_fallthru
    _
  %v4 = vld [vmem:[%s0] ss:$0 sm:$0xff]
  %5 = vst [vmem:[%s1] sm:$0xff] %v4
  %s6 = scalar_lea.vmem %s1, 8
  %7 = vst [vmem:[%s6] sm:$0xff] %v4

// kernel: tile.19
$region0: #{tile.19}
  %s0 = inlined_call_operand.vmem [shape: f32[16,8], index: 0, kind: input, shape index: {}]
  %s1 = inlined_call_operand.vmem [shape: f32[1,128], index: 1, kind: output, shape index: {}]
  $region1: #{tile.19} parent=0
    #allocation0 [shape = 'u8[4096]{0}', space=vmem, size = 0x1000, scoped, tag = 'scoped mem for output reshape']
    %v2 = vld [vmem:[%s0] sm:$0x1]
    %vm3 = vcmask 64512
    %4 = vst.msk [vmem:[#allocation0] sm:$0x1] %vm3, %v2
    %s5 = scalar_lea.vmem %s0, 15
    %v6 = vld [vmem:[%s5] sm:$0x1]
    %7 = vrot.lane.b32.xlu0 %v6, 120
    %v8 = vpop.permute.xlu0 %7
    %vm9 = vcmask 1048512
    %10 = vst.msk [vmem:[#allocation0] sm:$0x1] %vm9, %v8
    %s11 = scalar_lea.vmem %s0, 14
    %v12 = vld [vmem:[%s11] sm:$0x1]
    %13 = vrot.lane.b32.xlu0 %v12, 112
    %v14 = vpop.permute.xlu0 %13
    %vm15 = vcmask 982912
    %16 = vst.msk [vmem:[#allocation0] sm:$0x1] %vm15, %v14
    %s17 = scalar_lea.vmem %s0, 13
    %v18 = vld [vmem:[%s17] sm:$0x1]
    %19 = vrot.lane.b32.xlu0 %v18, 104
    %v20 = vpop.permute.xlu0 %19
    %vm21 = vcmask 917312
    %22 = vst.msk [vmem:[#allocation0] sm:$0x1] %vm21, %v20
    %s23 = scalar_lea.vmem %s0, 12
    %v24 = vld [vmem:[%s23] sm:$0x1]
    %25 = vrot.lane.b32.xlu0 %v24, 96
    %v26 = vpop.permute.xlu0 %25
    %vm27 = vcmask 851712
    %28 = vst.msk [vmem:[#allocation0] sm:$0x1] %vm27, %v26
    %s29 = scalar_lea.vmem %s0, 11
    %v30 = vld [vmem:[%s29] sm:$0x1]
    %31 = vrot.lane.b32.xlu0 %v30, 88
    %v32 = vpop.permute.xlu0 %31
    %vm33 = vcmask 786112
    %34 = vst.msk [vmem:[#allocation0] sm:$0x1] %vm33, %v32
    %s35 = scalar_lea.vmem %s0, 10
    %v36 = vld [vmem:[%s35] sm:$0x1]
    %37 = vrot.lane.b32.xlu0 %v36, 80
    %v38 = vpop.permute.xlu0 %37
    %vm39 = vcmask 720512
    %40 = vst.msk [vmem:[#allocation0] sm:$0x1] %vm39, %v38
    %s41 = scalar_lea.vmem %s0, 9
    %v42 = vld [vmem:[%s41] sm:$0x1]
    %43 = vrot.lane.b32.xlu0 %v42, 72
    %v44 = vpop.permute.xlu0 %43
    %vm45 = vcmask 654912
    %46 = vst.msk [vmem:[#allocation0] sm:$0x1] %vm45, %v44
    %s47 = scalar_lea.vmem %s0, 8
    %v48 = vld [vmem:[%s47] sm:$0x1]
    %49 = vrot.lane.b32.xlu0 %v48, 64
    %v50 = vpop.permute.xlu0 %49
    %vm51 = vcmask 589312
    %52 = vst.msk [vmem:[#allocation0] sm:$0x1] %vm51, %v50
    %s53 = scalar_lea.vmem %s0, 7
    %v54 = vld [vmem:[%s53] sm:$0x1]
    %55 = vrot.lane.b32.xlu0 %v54, 56
    %v56 = vpop.permute.xlu0 %55
    %vm57 = vcmask 523712
    %58 = vst.msk [vmem:[#allocation0] sm:$0x1] %vm57, %v56
    %s59 = scalar_lea.vmem %s0, 6
    %v60 = vld [vmem:[%s59] sm:$0x1]
    %61 = vrot.lane.b32.xlu0 %v60, 48
    %v62 = vpop.permute.xlu0 %61
    %vm63 = vcmask 458112
    %64 = vst.msk [vmem:[#allocation0] sm:$0x1] %vm63, %v62
    %s65 = scalar_lea.vmem %s0, 5
    %v66 = vld [vmem:[%s65] sm:$0x1]
    %67 = vrot.lane.b32.xlu0 %v66, 40
    %v68 = vpop.permute.xlu0 %67
    %vm69 = vcmask 392512
    %70 = vst.msk [vmem:[#allocation0] sm:$0x1] %vm69, %v68
    %s71 = scalar_lea.vmem %s0, 4
    %v72 = vld [vmem:[%s71] sm:$0x1]
    %73 = vrot.lane.b32.xlu0 %v72, 32
    %v74 = vpop.permute.xlu0 %73
    %vm75 = vcmask 326912
    %76 = vst.msk [vmem:[#allocation0] sm:$0x1] %vm75, %v74
    %s77 = scalar_lea.vmem %s0, 3
    %v78 = vld [vmem:[%s77] sm:$0x1]
    %79 = vrot.lane.b32.xlu0 %v78, 24
    %v80 = vpop.permute.xlu0 %79
    %vm81 = vcmask 261312
    %82 = vst.msk [vmem:[#allocation0] sm:$0x1] %vm81, %v80
    %s83 = scalar_lea.vmem %s0, 2
    %v84 = vld [vmem:[%s83] sm:$0x1]
    %85 = vrot.lane.b32.xlu0 %v84, 16
    %v86 = vpop.permute.xlu0 %85
    %vm87 = vcmask 195712
    %88 = vst.msk [vmem:[#allocation0] sm:$0x1] %vm87, %v86
    %s89 = scalar_lea.vmem %s0, 1
    %v90 = vld [vmem:[%s89] sm:$0x1]
    %91 = vrot.lane.b32.xlu0 %v90, 8
    %v92 = vpop.permute.xlu0 %91
    %vm93 = vcmask 130112
    %94 = vst.msk [vmem:[#allocation0] sm:$0x1] %vm93, %v92
    %s96 = sshll.u32 1, 1
    %s97 = ssub.s32 %s96, 1
    %v99 = vld [vmem:[#allocation0] sm:%s97]
    %s100 = sshll.u32 1, 1
    %s101 = ssub.s32 %s100, 1
    %102 = vst [vmem:[%s1] sm:%s101] %v99

// kernel: up_block_forward.3
$region0: #{up_block_forward.3}
  #allocation0 [shape = 'u32[]', space=smem, size = 0x4, offset = 0x4, fixed_abs, tag = 'smem constant byte address 0x4 - core index']
  #allocation1 [shape = 'u32[144,128]{1,0:T(1,128)}', space=vmem, size = 0x12000, scoped, tag = 'internal scratch']
  %s0 = inlined_call_operand.vmem [shape: f32[128,128], index: 0, kind: input, shape index: {}, may-alias: {0,3}]
  %s1 = inlined_call_operand.vmem [shape: f32[1,128], index: 1, kind: input, shape index: {}]
  %s2 = inlined_call_operand.vmem [shape: f32[1,128], index: 2, kind: input, shape index: {}]
  %s3 = inlined_call_operand.vmem [shape: f32[128,128], index: 3, kind: output, shape index: {}, may-alias: {0,3}]
  %s4 = sld [smem:[#allocation0]]
  $region22: #{up_block_forward.3} parent=0
    _
  %s6 = ssub.s32 1, %s4
  %s7 = scalar_select 0, %s6, %s4
  // Predicated region
  $region2: #{up_block_forward.3} parent=0 // pred_check
    _
  $region3: #{up_block_forward.3} parent=0 // pred_check_branch
    %9 = sbr.rel (0) target = $region5
  $region4: #{up_block_forward.3} parent=0 // pred_region
    _
  $region5: #{up_block_forward.3} parent=0 // pred_fallthru
    _
  // Predicated region
  $region6: #{up_block_forward.3} parent=0 // pred_check
    _
  $region7: #{up_block_forward.3} parent=0 // pred_check_branch
    %11 = sbr.rel (0) target = $region9
  $region8: #{up_block_forward.3} parent=0 // pred_region
    _
  $region9: #{up_block_forward.3} parent=0 // pred_fallthru
    _
  // Predicated region
  $region10: #{up_block_forward.3} parent=0 // pred_check
    _
  $region11: #{up_block_forward.3} parent=0 // pred_check_branch
    %13 = sbr.rel (0) target = $region13
  $region12: #{up_block_forward.3} parent=0 // pred_region
    _
  $region13: #{up_block_forward.3} parent=0 // pred_fallthru
    _
  %v14 = vld [vmem:[%s0] sm:$0xff]
  %v15 = vld [vmem:[%s0 + $0x8] sm:$0xff]
  %v16 = vld [vmem:[%s0 + $0x10] sm:$0xff]
  %v17 = vld [vmem:[%s0 + $0x18] sm:$0xff]
  %v18 = vld [vmem:[%s0 + $0x20] sm:$0xff]
  %v19 = vld [vmem:[%s0 + $0x28] sm:$0xff]
  %v20 = vld [vmem:[%s0 + $0x30] sm:$0xff]
  %v21 = vld [vmem:[%s0 + $0x38] sm:$0xff]
  %v22 = vld [vmem:[%s0 + $0x40] sm:$0xff]
  %v23 = vld [vmem:[%s0 + $0x48] sm:$0xff]
  %v24 = vld [vmem:[%s0 + $0x50] sm:$0xff]
  %v25 = vld [vmem:[%s0 + $0x58] sm:$0xff]
  %v26 = vld [vmem:[%s0 + $0x60] sm:$0xff]
  %v27 = vld [vmem:[%s0 + $0x68] sm:$0xff]
  %v28 = vld [vmem:[%s0 + $0x70] sm:$0xff]
  %v29 = vld [vmem:[%s0 + $0x78] sm:$0xff]
  %v30 = vld [vmem:[%s1] sm:$0x1]
  %v32 = vlaneseq
  %v33 = vshrl.u32 %v32, 7
  %v34 = vsub.s32 0, %v33
  %v35 = vrot.slane %v30, %v34
  %v37 = vmul.f32 %v14, %v35
  %v38 = vmul.f32 %v15, %v35
  %v39 = vmul.f32 %v16, %v35
  %v40 = vmul.f32 %v17, %v35
  %v41 = vmul.f32 %v18, %v35
  %v42 = vmul.f32 %v19, %v35
  %v43 = vmul.f32 %v20, %v35
  %v44 = vmul.f32 %v21, %v35
  %v45 = vmul.f32 %v22, %v35
  %v46 = vmul.f32 %v23, %v35
  %v47 = vmul.f32 %v24, %v35
  %v48 = vmul.f32 %v25, %v35
  %v49 = vmul.f32 %v26, %v35
  %v50 = vmul.f32 %v27, %v35
  %v51 = vmul.f32 %v28, %v35
  %v52 = vmul.f32 %v29, %v35
  %v53 = vld [vmem:[%s2] sm:$0x1]
  %v55 = vlaneseq
  %v56 = vshrl.u32 %v55, 7
  %v57 = vsub.s32 0, %v56
  %v58 = vrot.slane %v53, %v57
  %v60 = vadd.f32 %v37, %v58
  %v61 = vadd.f32 %v38, %v58
  %v62 = vadd.f32 %v39, %v58
  %v63 = vadd.f32 %v40, %v58
  %v64 = vadd.f32 %v41, %v58
  %v65 = vadd.f32 %v42, %v58
  %v66 = vadd.f32 %v43, %v58
  %v67 = vadd.f32 %v44, %v58
  %v68 = vadd.f32 %v45, %v58
  %v69 = vadd.f32 %v46, %v58
  %v70 = vadd.f32 %v47, %v58
  %v71 = vadd.f32 %v48, %v58
  %v72 = vadd.f32 %v49, %v58
  %v73 = vadd.f32 %v50, %v58
  %v74 = vadd.f32 %v51, %v58
  %v75 = vadd.f32 %v52, %v58
  %76 = vst [vmem:[%s3] sm:$0xff] %v60
  %77 = vst [vmem:[%s3 + $0x8] sm:$0xff] %v61
  %78 = vst [vmem:[%s3 + $0x10] sm:$0xff] %v62
  %79 = vst [vmem:[%s3 + $0x18] sm:$0xff] %v63
  %80 = vst [vmem:[%s3 + $0x20] sm:$0xff] %v64
  %81 = vst [vmem:[%s3 + $0x28] sm:$0xff] %v65
  %82 = vst [vmem:[%s3 + $0x30] sm:$0xff] %v66
  %83 = vst [vmem:[%s3 + $0x38] sm:$0xff] %v67
  %84 = vst [vmem:[%s3 + $0x40] sm:$0xff] %v68
  %85 = vst [vmem:[%s3 + $0x48] sm:$0xff] %v69
  %86 = vst [vmem:[%s3 + $0x50] sm:$0xff] %v70
  %87 = vst [vmem:[%s3 + $0x58] sm:$0xff] %v71
  %88 = vst [vmem:[%s3 + $0x60] sm:$0xff] %v72
  %89 = vst [vmem:[%s3 + $0x68] sm:$0xff] %v73
  %90 = vst [vmem:[%s3 + $0x70] sm:$0xff] %v74
  %91 = vst [vmem:[%s3 + $0x78] sm:$0xff] %v75
  // Predicated region
  $region14: #{up_block_forward.3} parent=0 // pred_check
    _
  $region15: #{up_block_forward.3} parent=0 // pred_check_branch
    %93 = sbr.rel (0) target = $region17
  $region16: #{up_block_forward.3} parent=0 // pred_region
    _
  $region17: #{up_block_forward.3} parent=0 // pred_fallthru
    _
  // Predicated region
  $region18: #{up_block_forward.3} parent=0 // pred_check
    _
  $region19: #{up_block_forward.3} parent=0 // pred_check_branch
    %95 = sbr.rel (0) target = $region21
  $region20: #{up_block_forward.3} parent=0 // pred_region
    _
  $region21: #{up_block_forward.3} parent=0 // pred_fallthru
    _

// kernel: up_block_forward.2
$region0: #{up_block_forward.2}
  #allocation0 [shape = 'u32[]', space=smem, size = 0x4, offset = 0x4, fixed_abs, tag = 'smem constant byte address 0x4 - core index']
  #allocation1 [shape = 'u32[144,128]{1,0:T(1,128)}', space=vmem, size = 0x12000, scoped, tag = 'internal scratch']
  %s0 = inlined_call_operand.vmem [shape: bf16[4,512,16], index: 0, kind: input, shape index: {}]
  %s1 = inlined_call_operand.vmem [shape: bf16[4,16,8], index: 1, kind: input, shape index: {}]
  %s2 = inlined_call_operand.vmem [shape: f32[4,512,8], index: 2, kind: output, shape index: {0}]
  %s3 = inlined_call_operand.vmem [shape: f32[4,1,8,8], index: 3, kind: output, shape index: {1}]
  %s4 = inlined_call_operand.vmem [shape: f32[4,1,8,8], index: 4, kind: output, shape index: {2}]
  %5 = xla_tuple %s2, %s3, %s4
  %s6 = sld [smem:[#allocation0]]
  $region57: #{up_block_forward.2} parent=0
    _
  %s8 = ssub.s32 1, %s6
  %s9 = scalar_select 0, %s8, %s6
  loop: start=0, step=1, limit=6
  $region2: #{up_block_forward.2} parent=0 // loop_pre_header
    _
  $region3: #{up_block_forward.2} parent=0 // loop_header
    %s11 = sphi 0, %s15
    %p12 = scmp.ge.s32.totalorder %s11, 6
    %s18 = sphi 0, %s30
    %s19 = sphi 0, %s26
    %s20 = sphi 0, %s18
    %s21 = sphi 0, %s19
    %s22 = sphi 0, %s20
    %s23 = sphi 0, %s21
    %s35 = sphi 0, %s37
    %s38 = sphi 0, %s35
    %s39 = sphi 0, %s38
    %s55 = sphi 0, %s39
    %s61 = sphi 0, %s63
    %s64 = sphi 0, %s61
    %s65 = sphi 0, %s64
    %s81 = sphi 0, %s65
    %s89 = sphi 0, %s91
    %s92 = sphi 0, %s89
    %s93 = sphi 0, %s92
    %s109 = sphi 0, %s93
    %s117 = sphi 0, %s119
    %s120 = sphi 0, %s117
    %s121 = sphi 0, %s120
    %s137 = sphi 0, %s121
    %s145 = sphi 0, %s147
    %s148 = sphi 0, %s145
    %s149 = sphi 0, %s148
    %s165 = sphi 0, %s149
  $region4: #{up_block_forward.2} parent=0 // loop_header_branch
    %14 = sbr.rel (%p12) target = $region8
  $region5: #{up_block_forward.2} parent=0 // loop_body
    %s16 = ssub.s32 %s11, 1
    %s17 = ssub.s32 %s11, 2
    %s24 = sadd.s32 1, %s19
    %p25 = scmp.ge.s32.totalorder %s24, 1
    %s26 = scalar_select %p25, 0, %s24
    %s27 = sadd.s32 1, %s18
    %s28 = scalar_select %p25, %s27, %s18
    %p29 = scmp.ge.s32.totalorder %s28, 4
    %s30 = scalar_select %p29, 0, %s28
    %s31 = ssub.s32 %s18, %s30
    %s32 = ssub.s32 %s19, %s26
    %s33 = sor.u32 %s31, %s32
    %p34 = scmp.eq.s32.totalorder %s33, 0
    %s36 = sadd.s32 %s35, 1
    %s37 = scalar_select %p34, %s35, %s36
    %p40 = pneg %p34
    %p41 = scmp.eq.s32.totalorder %s11, 3
    %p42 = por %p40, %p41
    %p43 = scmp.ne.s32.totalorder %s35, %s38
    %p44 = scmp.eq.s32.totalorder %s11, 0
    %p45 = por %p43, %p44
    %p46 = scmp.ne.s32.totalorder %s35, %s38
    %p47 = scmp.eq.s32.totalorder %s16, 3
    %p48 = por %p46, %p47
    %p49 = scmp.ne.s32.totalorder %s38, %s39
    %p50 = scmp.eq.s32.totalorder %s16, 0
    %p51 = por %p49, %p50
    %p52 = scmp.ne.s32.totalorder %s38, %s39
    %p53 = scmp.eq.s32.totalorder %s17, 3
    %p54 = por %p52, %p53
    %p56 = scmp.ne.s32.totalorder %s39, %s55
    %p57 = scmp.eq.s32.totalorder %s17, 0
    %p58 = por %p56, %p57
    %s59 = ssub.s32 %s18, %s30
    %p60 = scmp.eq.s32.totalorder %s59, 0
    %s62 = sadd.s32 %s61, 1
    %s63 = scalar_select %p60, %s61, %s62
    %p66 = pneg %p60
    %p67 = scmp.eq.s32.totalorder %s11, 3
    %p68 = por %p66, %p67
    %p69 = scmp.ne.s32.totalorder %s61, %s64
    %p70 = scmp.eq.s32.totalorder %s11, 0
    %p71 = por %p69, %p70
    %p72 = scmp.ne.s32.totalorder %s61, %s64
    %p73 = scmp.eq.s32.totalorder %s16, 3
    %p74 = por %p72, %p73
    %p75 = scmp.ne.s32.totalorder %s64, %s65
    %p76 = scmp.eq.s32.totalorder %s16, 0
    %p77 = por %p75, %p76
    %p78 = scmp.ne.s32.totalorder %s64, %s65
    %p79 = scmp.eq.s32.totalorder %s17, 3
    %p80 = por %p78, %p79
    %p82 = scmp.ne.s32.totalorder %s65, %s81
    %p83 = scmp.eq.s32.totalorder %s17, 0
    %p84 = por %p82, %p83
    %s85 = ssub.s32 %s18, %s30
    %s86 = ssub.s32 %s19, %s26
    %s87 = sor.u32 %s85, %s86
    %p88 = scmp.eq.s32.totalorder %s87, 0
    %s90 = sadd.s32 %s89, 1
    %s91 = scalar_select %p88, %s89, %s90
    %p94 = pneg %p88
    %p95 = scmp.eq.s32.totalorder %s11, 3
    %p96 = por %p94, %p95
    %p97 = scmp.ne.s32.totalorder %s89, %s92
    %p98 = scmp.eq.s32.totalorder %s11, 0
    %p99 = por %p97, %p98
    %p100 = scmp.ne.s32.totalorder %s89, %s92
    %p101 = scmp.eq.s32.totalorder %s16, 3
    %p102 = por %p100, %p101
    %p103 = scmp.ne.s32.totalorder %s92, %s93
    %p104 = scmp.eq.s32.totalorder %s16, 0
    %p105 = por %p103, %p104
    %p106 = scmp.ne.s32.totalorder %s92, %s93
    %p107 = scmp.eq.s32.totalorder %s17, 3
    %p108 = por %p106, %p107
    %p110 = scmp.ne.s32.totalorder %s93, %s109
    %p111 = scmp.eq.s32.totalorder %s17, 0
    %p112 = por %p110, %p111
    %s113 = ssub.s32 %s18, %s30
    %s114 = ssub.s32 %s19, %s26
    %s115 = sor.u32 %s113, %s114
    %p116 = scmp.eq.s32.totalorder %s115, 0
    %s118 = sadd.s32 %s117, 1
    %s119 = scalar_select %p116, %s117, %s118
    %p122 = pneg %p116
    %p123 = scmp.eq.s32.totalorder %s11, 3
    %p124 = por %p122, %p123
    %p125 = scmp.ne.s32.totalorder %s117, %s120
    %p126 = scmp.eq.s32.totalorder %s11, 0
    %p127 = por %p125, %p126
    %p128 = scmp.ne.s32.totalorder %s117, %s120
    %p129 = scmp.eq.s32.totalorder %s16, 3
    %p130 = por %p128, %p129
    %p131 = scmp.ne.s32.totalorder %s120, %s121
    %p132 = scmp.eq.s32.totalorder %s16, 0
    %p133 = por %p131, %p132
    %p134 = scmp.ne.s32.totalorder %s120, %s121
    %p135 = scmp.eq.s32.totalorder %s17, 3
    %p136 = por %p134, %p135
    %p138 = scmp.ne.s32.totalorder %s121, %s137
    %p139 = scmp.eq.s32.totalorder %s17, 0
    %p140 = por %p138, %p139
    %s141 = ssub.s32 %s18, %s30
    %s142 = ssub.s32 %s19, %s26
    %s143 = sor.u32 %s141, %s142
    %p144 = scmp.eq.s32.totalorder %s143, 0
    %s146 = sadd.s32 %s145, 1
    %s147 = scalar_select %p144, %s145, %s146
    %p150 = pneg %p144
    %p151 = scmp.eq.s32.totalorder %s11, 3
    %p152 = por %p150, %p151
    %p153 = scmp.ne.s32.totalorder %s145, %s148
    %p154 = scmp.eq.s32.totalorder %s11, 0
    %p155 = por %p153, %p154
    %p156 = scmp.ne.s32.totalorder %s145, %s148
    %p157 = scmp.eq.s32.totalorder %s16, 3
    %p158 = por %p156, %p157
    %p159 = scmp.ne.s32.totalorder %s148, %s149
    %p160 = scmp.eq.s32.totalorder %s16, 0
    %p161 = por %p159, %p160
    %p162 = scmp.ne.s32.totalorder %s148, %s149
    %p163 = scmp.eq.s32.totalorder %s17, 3
    %p164 = por %p162, %p163
    %p166 = scmp.ne.s32.totalorder %s149, %s165
    %p167 = scmp.eq.s32.totalorder %s17, 0
    %p168 = por %p166, %p167
    %p169 = scmp.le.s32.totalorder 1, %s11
    %p170 = scmp.lt.s32.totalorder %s11, 5
    %p171 = pnand %p169, %p170
    %p172 = pneg %p171
    // Predicated region
    $region9: #{up_block_forward.2} parent=5 // pred_check
      _
    $region10: #{up_block_forward.2} parent=5 // pred_check_branch
      %174 = sbr.rel (%p171) target = $region12
    $region11: #{up_block_forward.2} parent=5 // pred_region
      %s175 = ssub.s32 %s11, 1
    $region12: #{up_block_forward.2} parent=5 // pred_fallthru
      _
    %p176 = scmp.lt.s32.totalorder %s11, 4
    // Predicated region
    $region13: #{up_block_forward.2} parent=5 // pred_check
      %p177 = pneg %p176
    $region14: #{up_block_forward.2} parent=5 // pred_check_branch
      %179 = sbr.rel (%p177) target = $region16
    $region15: #{up_block_forward.2} parent=5 // pred_region
      // Predicated region
      $region17: #{up_block_forward.2} parent=15 // pred_check
        %p180 = pneg %p45
      $region18: #{up_block_forward.2} parent=15 // pred_check_branch
        %182 = sbr.rel (%p180) target = $region20
      $region19: #{up_block_forward.2} parent=15 // pred_region
        %s183 = smul.u32 64, %s19
        %p184 = scmp.lt.s32.totalorder %s18, 3
        %s185 = scalar_select %p184, %s18, 3
        %p186 = scmp.lt.s32.totalorder %s183, 63
        %s187 = scalar_select %p186, %s183, 63
        %s188 = smul.addr %s185, 64
        %s189 = sadd.s32 %s187, %s188
        %s190 = smul.addr %s189, 4
        %s191 = scalar_lea.vmem %s0, %s190
        %s192 = smul.u32 64, %s19
      $region20: #{up_block_forward.2} parent=15 // pred_fallthru
        _
      // Predicated region
      $region21: #{up_block_forward.2} parent=15 // pred_check
        %p193 = pneg %p71
      $region22: #{up_block_forward.2} parent=15 // pred_check_branch
        %195 = sbr.rel (%p193) target = $region24
      $region23: #{up_block_forward.2} parent=15 // pred_region
        %p196 = scmp.lt.s32.totalorder %s18, 3
        %s197 = scalar_select %p196, %s18, 3
        %s198 = smul.addr %s197, 2
        %s199 = smul.addr %s198, 4
        %s200 = scalar_lea.vmem %s1, %s199
      $region24: #{up_block_forward.2} parent=15 // pred_fallthru
        _
    $region16: #{up_block_forward.2} parent=5 // pred_fallthru
      _
    %p201 = scmp.le.s32.totalorder 1, %s11
    %p202 = scmp.lt.s32.totalorder %s11, 5
    %p203 = pnand %p201, %p202
    %p204 = pneg %p203
    // Predicated region
    $region25: #{up_block_forward.2} parent=5 // pred_check
      _
    $region26: #{up_block_forward.2} parent=5 // pred_check_branch
      %206 = sbr.rel (%p203) target = $region28
    $region27: #{up_block_forward.2} parent=5 // pred_region
      %s207 = ssub.s32 %s11, 1
      %s208 = smul.u32 64, %s21
      %p209 = scmp.lt.s32.totalorder %s20, 3
      %s210 = scalar_select %p209, %s20, 3
      %p211 = scmp.lt.s32.totalorder %s208, 63
      %s212 = scalar_select %p211, %s208, 63
      %s213 = smul.addr %s210, 64
      %s214 = sadd.s32 %s212, %s213
      %s215 = smul.addr %s214, 4
      %s216 = scalar_lea.vmem %s0, %s215
      %p217 = pneg %p51
      %p218 = pneg %p48
      %p219 = scmp.lt.s32.totalorder %s20, 3
      %s220 = scalar_select %p219, %s20, 3
      %s221 = smul.addr %s220, 2
      %s222 = smul.addr %s221, 4
      %s223 = scalar_lea.vmem %s1, %s222
      %p224 = pneg %p77
      %p225 = pneg %p74
      %p226 = pneg %p105
      %p227 = pneg %p102
      %s228 = smul.u32 64, %s21
      %p229 = scmp.lt.s32.totalorder %s20, 3
      %s230 = scalar_select %p229, %s20, 3
      %p231 = scmp.lt.s32.totalorder %s228, 63
      %s232 = scalar_select %p231, %s228, 63
      %s233 = smul.addr %s230, 64
      %s234 = sadd.s32 %s232, %s233
      %s235 = smul.addr %s234, 8
      %s236 = scalar_lea.vmem %s2, %s235
      %p237 = pneg %p133
      %p238 = pneg %p130
      %p239 = scmp.lt.s32.totalorder %s20, 3
      %s240 = scalar_select %p239, %s20, 3
      %p241 = scmp.lt.s32.totalorder %s21, 0
      %s242 = scalar_select %p241, %s21, 0
      %s243 = sadd.s32 %s242, %s240
      %s244 = smul.addr %s243, 8
      %s245 = scalar_lea.vmem %s3, %s244
      %p246 = pneg %p161
      %p247 = pneg %p158
      %p248 = scmp.lt.s32.totalorder %s20, 3
      %s249 = scalar_select %p248, %s20, 3
      %p250 = scmp.lt.s32.totalorder %s21, 0
      %s251 = scalar_select %p250, %s21, 0
      %s252 = sadd.s32 %s251, %s249
      %s253 = smul.addr %s252, 8
      %s254 = scalar_lea.vmem %s4, %s253
      %s255 = smul.u32 64, %s21
      %p256 = scmp.lt.s32.totalorder %s20, 3
      %s257 = scalar_select %p256, %s20, 3
      %p258 = scmp.lt.s32.totalorder %s255, 63
      %s259 = scalar_select %p258, %s255, 63
      %s260 = smul.addr %s257, 64
      %s261 = sadd.s32 %s259, %s260
      %s262 = smul.addr %s261, 4
      %s263 = scalar_lea.vmem %s0, %s262
      %s264 = smul.u32 64, %s21
      %p265 = scmp.lt.s32.totalorder %s20, 3
      %s266 = scalar_select %p265, %s20, 3
      %s267 = smul.addr %s266, 2
      %s268 = smul.addr %s267, 4
      %s269 = scalar_lea.vmem %s1, %s268
      %s270 = smul.u32 64, %s21
      %p271 = scmp.lt.s32.totalorder %s20, 3
      %s272 = scalar_select %p271, %s20, 3
      %p273 = scmp.lt.s32.totalorder %s270, 63
      %s274 = scalar_select %p273, %s270, 63
      %s275 = smul.addr %s272, 64
      %s276 = sadd.s32 %s274, %s275
      %s277 = smul.addr %s276, 8
      %s278 = scalar_lea.vmem %s2, %s277
      %s279 = smul.u32 64, %s21
      %p280 = scmp.lt.s32.totalorder %s20, 3
      %s281 = scalar_select %p280, %s20, 3
      %p282 = scmp.lt.s32.totalorder %s21, 0
      %s283 = scalar_select %p282, %s21, 0
      %s284 = sadd.s32 %s283, %s281
      %s285 = smul.addr %s284, 8
      %s286 = scalar_lea.vmem %s3, %s285
      %p287 = scmp.lt.s32.totalorder %s20, 3
      %s288 = scalar_select %p287, %s20, 3
      %p289 = scmp.lt.s32.totalorder %s21, 0
      %s290 = scalar_select %p289, %s21, 0
      %s291 = sadd.s32 %s290, %s288
      %s292 = smul.addr %s291, 8
      %s293 = scalar_lea.vmem %s4, %s292
      %v295 = vld [vmem:[%s263] sm:$0xf]
      %v296 = vld [vmem:[%s263 + $0x4] sm:$0xf]
      %v297 = vld [vmem:[%s263 + $0x8] sm:$0xf]
      %v298 = vld [vmem:[%s263 + $0xc] sm:$0xf]
      %v299 = vld [vmem:[%s263 + $0x10] sm:$0xf]
      %v300 = vld [vmem:[%s263 + $0x14] sm:$0xf]
      %v301 = vld [vmem:[%s263 + $0x18] sm:$0xf]
      %v302 = vld [vmem:[%s263 + $0x1c] sm:$0xf]
      %v303 = vld [vmem:[%s263 + $0x20] sm:$0xf]
      %v304 = vld [vmem:[%s263 + $0x24] sm:$0xf]
      %v305 = vld [vmem:[%s263 + $0x28] sm:$0xf]
      %v306 = vld [vmem:[%s263 + $0x2c] sm:$0xf]
      %v307 = vld [vmem:[%s263 + $0x30] sm:$0xf]
      %v308 = vld [vmem:[%s263 + $0x34] sm:$0xf]
      %v309 = vld [vmem:[%s263 + $0x38] sm:$0xf]
      %v310 = vld [vmem:[%s263 + $0x3c] sm:$0xf]
      %v311 = vld [vmem:[%s263 + $0x40] sm:$0xf]
      %v312 = vld [vmem:[%s263 + $0x44] sm:$0xf]
      %v313 = vld [vmem:[%s263 + $0x48] sm:$0xf]
      %v314 = vld [vmem:[%s263 + $0x4c] sm:$0xf]
      %v315 = vld [vmem:[%s263 + $0x50] sm:$0xf]
      %v316 = vld [vmem:[%s263 + $0x54] sm:$0xf]
      %v317 = vld [vmem:[%s263 + $0x58] sm:$0xf]
      %v318 = vld [vmem:[%s263 + $0x5c] sm:$0xf]
      %v319 = vld [vmem:[%s263 + $0x60] sm:$0xf]
      %v320 = vld [vmem:[%s263 + $0x64] sm:$0xf]
      %v321 = vld [vmem:[%s263 + $0x68] sm:$0xf]
      %v322 = vld [vmem:[%s263 + $0x6c] sm:$0xf]
      %v323 = vld [vmem:[%s263 + $0x70] sm:$0xf]
      %v324 = vld [vmem:[%s263 + $0x74] sm:$0xf]
      %v325 = vld [vmem:[%s263 + $0x78] sm:$0xf]
      %v326 = vld [vmem:[%s263 + $0x7c] sm:$0xf]
      %v327 = vld [vmem:[%s263 + $0x80] sm:$0xf]
      %v328 = vld [vmem:[%s263 + $0x84] sm:$0xf]
      %v329 = vld [vmem:[%s263 + $0x88] sm:$0xf]
      %v330 = vld [vmem:[%s263 + $0x8c] sm:$0xf]
      %v331 = vld [vmem:[%s263 + $0x90] sm:$0xf]
      %v332 = vld [vmem:[%s263 + $0x94] sm:$0xf]
      %v333 = vld [vmem:[%s263 + $0x98] sm:$0xf]
      %v334 = vld [vmem:[%s263 + $0x9c] sm:$0xf]
      %v335 = vld [vmem:[%s263 + $0xa0] sm:$0xf]
      %v336 = vld [vmem:[%s263 + $0xa4] sm:$0xf]
      %v337 = vld [vmem:[%s263 + $0xa8] sm:$0xf]
      %v338 = vld [vmem:[%s263 + $0xac] sm:$0xf]
      %v339 = vld [vmem:[%s263 + $0xb0] sm:$0xf]
      %v340 = vld [vmem:[%s263 + $0xb4] sm:$0xf]
      %v341 = vld [vmem:[%s263 + $0xb8] sm:$0xf]
      %v342 = vld [vmem:[%s263 + $0xbc] sm:$0xf]
      %v343 = vld [vmem:[%s263 + $0xc0] sm:$0xf]
      %v344 = vld [vmem:[%s263 + $0xc4] sm:$0xf]
      %v345 = vld [vmem:[%s263 + $0xc8] sm:$0xf]
      %v346 = vld [vmem:[%s263 + $0xcc] sm:$0xf]
      %v347 = vld [vmem:[%s263 + $0xd0] sm:$0xf]
      %v348 = vld [vmem:[%s263 + $0xd4] sm:$0xf]
      %v349 = vld [vmem:[%s263 + $0xd8] sm:$0xf]
      %v350 = vld [vmem:[%s263 + $0xdc] sm:$0xf]
      %v351 = vld [vmem:[%s263 + $0xe0] sm:$0xf]
      %v352 = vld [vmem:[%s263 + $0xe4] sm:$0xf]
      %v353 = vld [vmem:[%s263 + $0xe8] sm:$0xf]
      %v354 = vld [vmem:[%s263 + $0xec] sm:$0xf]
      %v355 = vld [vmem:[%s263 + $0xf0] sm:$0xf]
      %v356 = vld [vmem:[%s263 + $0xf4] sm:$0xf]
      %v357 = vld [vmem:[%s263 + $0xf8] sm:$0xf]
      %v358 = vld [vmem:[%s263 + $0xfc] sm:$0xf]
      %v359 = vmax.bf16 %v295, 0
      %v360 = vmax.bf16 %v296, 0
      %v361 = vmax.bf16 %v297, 0
      %v362 = vmax.bf16 %v298, 0
      %v363 = vmax.bf16 %v299, 0
      %v364 = vmax.bf16 %v300, 0
      %v365 = vmax.bf16 %v301, 0
      %v366 = vmax.bf16 %v302, 0
      %v367 = vmax.bf16 %v303, 0
      %v368 = vmax.bf16 %v304, 0
      %v369 = vmax.bf16 %v305, 0
      %v370 = vmax.bf16 %v306, 0
      %v371 = vmax.bf16 %v307, 0
      %v372 = vmax.bf16 %v308, 0
      %v373 = vmax.bf16 %v309, 0
      %v374 = vmax.bf16 %v310, 0
      %v375 = vmax.bf16 %v311, 0
      %v376 = vmax.bf16 %v312, 0
      %v377 = vmax.bf16 %v313, 0
      %v378 = vmax.bf16 %v314, 0
      %v379 = vmax.bf16 %v315, 0
      %v380 = vmax.bf16 %v316, 0
      %v381 = vmax.bf16 %v317, 0
      %v382 = vmax.bf16 %v318, 0
      %v383 = vmax.bf16 %v319, 0
      %v384 = vmax.bf16 %v320, 0
      %v385 = vmax.bf16 %v321, 0
      %v386 = vmax.bf16 %v322, 0
      %v387 = vmax.bf16 %v323, 0
      %v388 = vmax.bf16 %v324, 0
      %v389 = vmax.bf16 %v325, 0
      %v390 = vmax.bf16 %v326, 0
      %v391 = vmax.bf16 %v327, 0
      %v392 = vmax.bf16 %v328, 0
      %v393 = vmax.bf16 %v329, 0
      %v394 = vmax.bf16 %v330, 0
      %v395 = vmax.bf16 %v331, 0
      %v396 = vmax.bf16 %v332, 0
      %v397 = vmax.bf16 %v333, 0
      %v398 = vmax.bf16 %v334, 0
      %v399 = vmax.bf16 %v335, 0
      %v400 = vmax.bf16 %v336, 0
      %v401 = vmax.bf16 %v337, 0
      %v402 = vmax.bf16 %v338, 0
      %v403 = vmax.bf16 %v339, 0
      %v404 = vmax.bf16 %v340, 0
      %v405 = vmax.bf16 %v341, 0
      %v406 = vmax.bf16 %v342, 0
      %v407 = vmax.bf16 %v343, 0
      %v408 = vmax.bf16 %v344, 0
      %v409 = vmax.bf16 %v345, 0
      %v410 = vmax.bf16 %v346, 0
      %v411 = vmax.bf16 %v347, 0
      %v412 = vmax.bf16 %v348, 0
      %v413 = vmax.bf16 %v349, 0
      %v414 = vmax.bf16 %v350, 0
      %v415 = vmax.bf16 %v351, 0
      %v416 = vmax.bf16 %v352, 0
      %v417 = vmax.bf16 %v353, 0
      %v418 = vmax.bf16 %v354, 0
      %v419 = vmax.bf16 %v355, 0
      %v420 = vmax.bf16 %v356, 0
      %v421 = vmax.bf16 %v357, 0
      %v422 = vmax.bf16 %v358, 0
      %v423 = vld [vmem:[%s269] sm:$0xf]
      %v424 = vld [vmem:[%s269 + $0x4] sm:$0xf]
      %v489 = vunpack.c.l.b16 %v359
      %v490 = vunpack.c.l.b16 %v360
      %v491 = vunpack.c.l.b16 %v361
      %v492 = vunpack.c.l.b16 %v362
      %v493 = vunpack.c.l.b16 %v363
      %v494 = vunpack.c.l.b16 %v364
      %v495 = vunpack.c.l.b16 %v365
      %v496 = vunpack.c.l.b16 %v366
      %v497 = vunpack.c.l.b16 %v367
      %v498 = vunpack.c.l.b16 %v368
      %v499 = vunpack.c.l.b16 %v369
      %v500 = vunpack.c.l.b16 %v370
      %v501 = vunpack.c.l.b16 %v371
      %v502 = vunpack.c.l.b16 %v372
      %v503 = vunpack.c.l.b16 %v373
      %v504 = vunpack.c.l.b16 %v374
      %v505 = vunpack.c.l.b16 %v375
      %v506 = vunpack.c.l.b16 %v376
      %v507 = vunpack.c.l.b16 %v377
      %v508 = vunpack.c.l.b16 %v378
      %v509 = vunpack.c.l.b16 %v379
      %v510 = vunpack.c.l.b16 %v380
      %v511 = vunpack.c.l.b16 %v381
      %v512 = vunpack.c.l.b16 %v382
      %v513 = vunpack.c.l.b16 %v383
      %v514 = vunpack.c.l.b16 %v384
      %v515 = vunpack.c.l.b16 %v385
      %v516 = vunpack.c.l.b16 %v386
      %v517 = vunpack.c.l.b16 %v387
      %v518 = vunpack.c.l.b16 %v388
      %v519 = vunpack.c.l.b16 %v389
      %v520 = vunpack.c.l.b16 %v390
      %v521 = vunpack.c.l.b16 %v391
      %v522 = vunpack.c.l.b16 %v392
      %v523 = vunpack.c.l.b16 %v393
      %v524 = vunpack.c.l.b16 %v394
      %v525 = vunpack.c.l.b16 %v395
      %v526 = vunpack.c.l.b16 %v396
      %v527 = vunpack.c.l.b16 %v397
      %v528 = vunpack.c.l.b16 %v398
      %v529 = vunpack.c.l.b16 %v399
      %v530 = vunpack.c.l.b16 %v400
      %v531 = vunpack.c.l.b16 %v401
      %v532 = vunpack.c.l.b16 %v402
      %v533 = vunpack.c.l.b16 %v403
      %v534 = vunpack.c.l.b16 %v404
      %v535 = vunpack.c.l.b16 %v405
      %v536 = vunpack.c.l.b16 %v406
      %v537 = vunpack.c.l.b16 %v407
      %v538 = vunpack.c.l.b16 %v408
      %v539 = vunpack.c.l.b16 %v409
      %v540 = vunpack.c.l.b16 %v410
      %v541 = vunpack.c.l.b16 %v411
      %v542 = vunpack.c.l.b16 %v412
      %v543 = vunpack.c.l.b16 %v413
      %v544 = vunpack.c.l.b16 %v414
      %v545 = vunpack.c.l.b16 %v415
      %v546 = vunpack.c.l.b16 %v416
      %v547 = vunpack.c.l.b16 %v417
      %v548 = vunpack.c.l.b16 %v418
      %v549 = vunpack.c.l.b16 %v419
      %v550 = vunpack.c.l.b16 %v420
      %v551 = vunpack.c.l.b16 %v421
      %v552 = vunpack.c.l.b16 %v422
      %v553 = vpack.c.b16 %v490, %v489
      %v554 = vpack.c.b16 %v492, %v491
      %v555 = vpack.c.b16 %v494, %v493
      %v556 = vpack.c.b16 %v496, %v495
      %v557 = vpack.c.b16 %v498, %v497
      %v558 = vpack.c.b16 %v500, %v499
      %v559 = vpack.c.b16 %v502, %v501
      %v560 = vpack.c.b16 %v504, %v503
      %v561 = vpack.c.b16 %v506, %v505
      %v562 = vpack.c.b16 %v508, %v507
      %v563 = vpack.c.b16 %v510, %v509
      %v564 = vpack.c.b16 %v512, %v511
      %v565 = vpack.c.b16 %v514, %v513
      %v566 = vpack.c.b16 %v516, %v515
      %v567 = vpack.c.b16 %v518, %v517
      %v568 = vpack.c.b16 %v520, %v519
      %v569 = vpack.c.b16 %v522, %v521
      %v570 = vpack.c.b16 %v524, %v523
      %v571 = vpack.c.b16 %v526, %v525
      %v572 = vpack.c.b16 %v528, %v527
      %v573 = vpack.c.b16 %v530, %v529
      %v574 = vpack.c.b16 %v532, %v531
      %v575 = vpack.c.b16 %v534, %v533
      %v576 = vpack.c.b16 %v536, %v535
      %v577 = vpack.c.b16 %v538, %v537
      %v578 = vpack.c.b16 %v540, %v539
      %v579 = vpack.c.b16 %v542, %v541
      %v580 = vpack.c.b16 %v544, %v543
      %v581 = vpack.c.b16 %v546, %v545
      %v582 = vpack.c.b16 %v548, %v547
      %v583 = vpack.c.b16 %v550, %v549
      %v584 = vpack.c.b16 %v552, %v551
      %v587 = vunpack.c.l.b16 %v423
      %v588 = vunpack.c.l.b16 %v424
      %v589 = vpack.c.b16 %v588, %v587
      %vm591 = vcmask 130048
      %v593 = vsel %vm591, %v553, 0
      %v596 = vsel %vm591, %v554, 0
      %v599 = vsel %vm591, %v555, 0
      %v602 = vsel %vm591, %v556, 0
      %v605 = vsel %vm591, %v557, 0
      %v608 = vsel %vm591, %v558, 0
      %v611 = vsel %vm591, %v559, 0
      %v614 = vsel %vm591, %v560, 0
      %v617 = vsel %vm591, %v561, 0
      %v620 = vsel %vm591, %v562, 0
      %v623 = vsel %vm591, %v563, 0
      %v626 = vsel %vm591, %v564, 0
      %v629 = vsel %vm591, %v565, 0
      %v632 = vsel %vm591, %v566, 0
      %v635 = vsel %vm591, %v567, 0
      %v638 = vsel %vm591, %v568, 0
      %v641 = vsel %vm591, %v569, 0
      %v644 = vsel %vm591, %v570, 0
      %v647 = vsel %vm591, %v571, 0
      %v650 = vsel %vm591, %v572, 0
      %v653 = vsel %vm591, %v573, 0
      %v656 = vsel %vm591, %v574, 0
      %v659 = vsel %vm591, %v575, 0
      %v662 = vsel %vm591, %v576, 0
      %v665 = vsel %vm591, %v577, 0
      %v668 = vsel %vm591, %v578, 0
      %v671 = vsel %vm591, %v579, 0
      %v674 = vsel %vm591, %v580, 0
      %v677 = vsel %vm591, %v581, 0
      %v680 = vsel %vm591, %v582, 0
      %v683 = vsel %vm591, %v583, 0
      %v686 = vsel %vm591, %v584, 0
      %688 = vmatprep.subr.bf16.mxu0 0
      %689 = vmatpush1.bf16.msra.mxu0 0
      %690 = vmatprep.subr.bf16.mxu0 0
      %691 = vmatpush1.bf16.msra.mxu0 0
      %692 = vmatprep.subr.bf16.mxu0 0
      %693 = vmatpush1.bf16.msra.mxu0 0
      %694 = vmatprep.subr.bf16.mxu0 0
      %695 = vmatpush1.bf16.msra.mxu0 0
      %696 = vmatprep.subr.bf16.mxu0 0
      %697 = vmatpush1.bf16.msra.mxu0 0
      %698 = vmatprep.subr.bf16.mxu0 0
      %699 = vmatpush1.bf16.msra.mxu0 0
      %700 = vmatprep.subr.bf16.mxu0 0
      %701 = vmatpush1.bf16.msra.mxu0 0
      %702 = vmatprep.subr.bf16.mxu0 0
      %703 = vmatpush1.bf16.msra.mxu0 %v589
      %704 = vmatprep.subr.bf16.mxu0 0
      %705 = vmatpush2.bf16.msra.mxu0 0
      %706 = vmatprep.subr.bf16.mxu0 0
      %707 = vmatpush2.bf16.msra.mxu0 0
      %708 = vmatprep.subr.bf16.mxu0 0
      %709 = vmatpush2.bf16.msra.mxu0 0
      %710 = vmatprep.subr.bf16.mxu0 0
      %711 = vmatpush2.bf16.msra.mxu0 0
      %712 = vmatprep.subr.bf16.mxu0 0
      %713 = vmatpush2.bf16.msra.mxu0 0
      %714 = vmatprep.subr.bf16.mxu0 0
      %715 = vmatpush2.bf16.msra.mxu0 0
      %716 = vmatprep.subr.bf16.mxu0 0
      %717 = vmatpush2.bf16.msra.mxu0 0
      %718 = vmatprep.subr.bf16.mxu0 0
      %719 = vmatpush2.bf16.msra.mxu0 0
      %720 = vmatprep.mubr.bf16.mxu0 0
      %721 = vmatmul.mubr.bf16.gmra.mxu0 %v593
      %v722 = vpop.f32.mrf.mxu0
      %v723 = vadd.f32 0.0, %v722
      %v724 = vpop.f32.mrf.mxu0
      %v725 = vpop.f32.mrf.mxu0
      %v726 = vadd.f32 0.0, %v725
      %v727 = vpop.f32.mrf.mxu0
      %728 = vmatprep.mubr.bf16.mxu0 0
      %729 = vmatmul.mubr.bf16.gmra.mxu0 %v596
      %v730 = vpop.f32.mrf.mxu0
      %v731 = vadd.f32 0.0, %v730
      %v732 = vpop.f32.mrf.mxu0
      %v733 = vpop.f32.mrf.mxu0
      %v734 = vadd.f32 0.0, %v733
      %v735 = vpop.f32.mrf.mxu0
      %736 = vmatprep.mubr.bf16.mxu0 0
      %737 = vmatmul.mubr.bf16.gmra.mxu0 %v599
      %v738 = vpop.f32.mrf.mxu0
      %v739 = vadd.f32 0.0, %v738
      %v740 = vpop.f32.mrf.mxu0
      %v741 = vpop.f32.mrf.mxu0
      %v742 = vadd.f32 0.0, %v741
      %v743 = vpop.f32.mrf.mxu0
      %744 = vmatprep.mubr.bf16.mxu0 0
      %745 = vmatmul.mubr.bf16.gmra.mxu0 %v602
      %v746 = vpop.f32.mrf.mxu0
      %v747 = vadd.f32 0.0, %v746
      %v748 = vpop.f32.mrf.mxu0
      %v749 = vpop.f32.mrf.mxu0
      %v750 = vadd.f32 0.0, %v749
      %v751 = vpop.f32.mrf.mxu0
      %752 = vmatprep.mubr.bf16.mxu0 0
      %753 = vmatmul.mubr.bf16.gmra.mxu0 %v605
      %v754 = vpop.f32.mrf.mxu0
      %v755 = vadd.f32 0.0, %v754
      %v756 = vpop.f32.mrf.mxu0
      %v757 = vpop.f32.mrf.mxu0
      %v758 = vadd.f32 0.0, %v757
      %v759 = vpop.f32.mrf.mxu0
      %760 = vmatprep.mubr.bf16.mxu0 0
      %761 = vmatmul.mubr.bf16.gmra.mxu0 %v608
      %v762 = vpop.f32.mrf.mxu0
      %v763 = vadd.f32 0.0, %v762
      %v764 = vpop.f32.mrf.mxu0
      %v765 = vpop.f32.mrf.mxu0
      %v766 = vadd.f32 0.0, %v765
      %v767 = vpop.f32.mrf.mxu0
      %768 = vmatprep.mubr.bf16.mxu0 0
      %769 = vmatmul.mubr.bf16.gmra.mxu0 %v611
      %v770 = vpop.f32.mrf.mxu0
      %v771 = vadd.f32 0.0, %v770
      %v772 = vpop.f32.mrf.mxu0
      %v773 = vpop.f32.mrf.mxu0
      %v774 = vadd.f32 0.0, %v773
      %v775 = vpop.f32.mrf.mxu0
      %776 = vmatprep.mubr.bf16.mxu0 0
      %777 = vmatmul.mubr.bf16.gmra.mxu0 %v614
      %v778 = vpop.f32.mrf.mxu0
      %v779 = vadd.f32 0.0, %v778
      %v780 = vpop.f32.mrf.mxu0
      %v781 = vpop.f32.mrf.mxu0
      %v782 = vadd.f32 0.0, %v781
      %v783 = vpop.f32.mrf.mxu0
      %784 = vmatprep.mubr.bf16.mxu0 0
      %785 = vmatmul.mubr.bf16.gmra.mxu0 %v617
      %v786 = vpop.f32.mrf.mxu0
      %v787 = vadd.f32 0.0, %v786
      %v788 = vpop.f32.mrf.mxu0
      %v789 = vpop.f32.mrf.mxu0
      %v790 = vadd.f32 0.0, %v789
      %v791 = vpop.f32.mrf.mxu0
      %792 = vmatprep.mubr.bf16.mxu0 0
      %793 = vmatmul.mubr.bf16.gmra.mxu0 %v620
      %v794 = vpop.f32.mrf.mxu0
      %v795 = vadd.f32 0.0, %v794
      %v796 = vpop.f32.mrf.mxu0
      %v797 = vpop.f32.mrf.mxu0
      %v798 = vadd.f32 0.0, %v797
      %v799 = vpop.f32.mrf.mxu0
      %800 = vmatprep.mubr.bf16.mxu0 0
      %801 = vmatmul.mubr.bf16.gmra.mxu0 %v623
      %v802 = vpop.f32.mrf.mxu0
      %v803 = vadd.f32 0.0, %v802
      %v804 = vpop.f32.mrf.mxu0
      %v805 = vpop.f32.mrf.mxu0
      %v806 = vadd.f32 0.0, %v805
      %v807 = vpop.f32.mrf.mxu0
      %808 = vmatprep.mubr.bf16.mxu0 0
      %809 = vmatmul.mubr.bf16.gmra.mxu0 %v626
      %v810 = vpop.f32.mrf.mxu0
      %v811 = vadd.f32 0.0, %v810
      %v812 = vpop.f32.mrf.mxu0
      %v813 = vpop.f32.mrf.mxu0
      %v814 = vadd.f32 0.0, %v813
      %v815 = vpop.f32.mrf.mxu0
      %816 = vmatprep.mubr.bf16.mxu0 0
      %817 = vmatmul.mubr.bf16.gmra.mxu0 %v629
      %v818 = vpop.f32.mrf.mxu0
      %v819 = vadd.f32 0.0, %v818
      %v820 = vpop.f32.mrf.mxu0
      %v821 = vpop.f32.mrf.mxu0
      %v822 = vadd.f32 0.0, %v821
      %v823 = vpop.f32.mrf.mxu0
      %824 = vmatprep.mubr.bf16.mxu0 0
      %825 = vmatmul.mubr.bf16.gmra.mxu0 %v632
      %v826 = vpop.f32.mrf.mxu0
      %v827 = vadd.f32 0.0, %v826
      %v828 = vpop.f32.mrf.mxu0
      %v829 = vpop.f32.mrf.mxu0
      %v830 = vadd.f32 0.0, %v829
      %v831 = vpop.f32.mrf.mxu0
      %832 = vmatprep.mubr.bf16.mxu0 0
      %833 = vmatmul.mubr.bf16.gmra.mxu0 %v635
      %v834 = vpop.f32.mrf.mxu0
      %v835 = vadd.f32 0.0, %v834
      %v836 = vpop.f32.mrf.mxu0
      %v837 = vpop.f32.mrf.mxu0
      %v838 = vadd.f32 0.0, %v837
      %v839 = vpop.f32.mrf.mxu0
      %840 = vmatprep.mubr.bf16.mxu0 0
      %841 = vmatmul.mubr.bf16.gmra.mxu0 %v638
      %v842 = vpop.f32.mrf.mxu0
      %v843 = vadd.f32 0.0, %v842
      %v844 = vpop.f32.mrf.mxu0
      %v845 = vpop.f32.mrf.mxu0
      %v846 = vadd.f32 0.0, %v845
      %v847 = vpop.f32.mrf.mxu0
      %848 = vmatprep.mubr.bf16.mxu0 0
      %849 = vmatmul.mubr.bf16.gmra.mxu0 %v641
      %v850 = vpop.f32.mrf.mxu0
      %v851 = vadd.f32 0.0, %v850
      %v852 = vpop.f32.mrf.mxu0
      %v853 = vpop.f32.mrf.mxu0
      %v854 = vadd.f32 0.0, %v853
      %v855 = vpop.f32.mrf.mxu0
      %856 = vmatprep.mubr.bf16.mxu0 0
      %857 = vmatmul.mubr.bf16.gmra.mxu0 %v644
      %v858 = vpop.f32.mrf.mxu0
      %v859 = vadd.f32 0.0, %v858
      %v860 = vpop.f32.mrf.mxu0
      %v861 = vpop.f32.mrf.mxu0
      %v862 = vadd.f32 0.0, %v861
      %v863 = vpop.f32.mrf.mxu0
      %864 = vmatprep.mubr.bf16.mxu0 0
      %865 = vmatmul.mubr.bf16.gmra.mxu0 %v647
      %v866 = vpop.f32.mrf.mxu0
      %v867 = vadd.f32 0.0, %v866
      %v868 = vpop.f32.mrf.mxu0
      %v869 = vpop.f32.mrf.mxu0
      %v870 = vadd.f32 0.0, %v869
      %v871 = vpop.f32.mrf.mxu0
      %872 = vmatprep.mubr.bf16.mxu0 0
      %873 = vmatmul.mubr.bf16.gmra.mxu0 %v650
      %v874 = vpop.f32.mrf.mxu0
      %v875 = vadd.f32 0.0, %v874
      %v876 = vpop.f32.mrf.mxu0
      %v877 = vpop.f32.mrf.mxu0
      %v878 = vadd.f32 0.0, %v877
      %v879 = vpop.f32.mrf.mxu0
      %880 = vmatprep.mubr.bf16.mxu0 0
      %881 = vmatmul.mubr.bf16.gmra.mxu0 %v653
      %v882 = vpop.f32.mrf.mxu0
      %v883 = vadd.f32 0.0, %v882
      %v884 = vpop.f32.mrf.mxu0
      %v885 = vpop.f32.mrf.mxu0
      %v886 = vadd.f32 0.0, %v885
      %v887 = vpop.f32.mrf.mxu0
      %888 = vmatprep.mubr.bf16.mxu0 0
      %889 = vmatmul.mubr.bf16.gmra.mxu0 %v656
      %v890 = vpop.f32.mrf.mxu0
      %v891 = vadd.f32 0.0, %v890
      %v892 = vpop.f32.mrf.mxu0
      %v893 = vpop.f32.mrf.mxu0
      %v894 = vadd.f32 0.0, %v893
      %v895 = vpop.f32.mrf.mxu0
      %896 = vmatprep.mubr.bf16.mxu0 0
      %897 = vmatmul.mubr.bf16.gmra.mxu0 %v659
      %v898 = vpop.f32.mrf.mxu0
      %v899 = vadd.f32 0.0, %v898
      %v900 = vpop.f32.mrf.mxu0
      %v901 = vpop.f32.mrf.mxu0
      %v902 = vadd.f32 0.0, %v901
      %v903 = vpop.f32.mrf.mxu0
      %904 = vmatprep.mubr.bf16.mxu0 0
      %905 = vmatmul.mubr.bf16.gmra.mxu0 %v662
      %v906 = vpop.f32.mrf.mxu0
      %v907 = vadd.f32 0.0, %v906
      %v908 = vpop.f32.mrf.mxu0
      %v909 = vpop.f32.mrf.mxu0
      %v910 = vadd.f32 0.0, %v909
      %v911 = vpop.f32.mrf.mxu0
      %912 = vmatprep.mubr.bf16.mxu0 0
      %913 = vmatmul.mubr.bf16.gmra.mxu0 %v665
      %v914 = vpop.f32.mrf.mxu0
      %v915 = vadd.f32 0.0, %v914
      %v916 = vpop.f32.mrf.mxu0
      %v917 = vpop.f32.mrf.mxu0
      %v918 = vadd.f32 0.0, %v917
      %v919 = vpop.f32.mrf.mxu0
      %920 = vmatprep.mubr.bf16.mxu0 0
      %921 = vmatmul.mubr.bf16.gmra.mxu0 %v668
      %v922 = vpop.f32.mrf.mxu0
      %v923 = vadd.f32 0.0, %v922
      %v924 = vpop.f32.mrf.mxu0
      %v925 = vpop.f32.mrf.mxu0
      %v926 = vadd.f32 0.0, %v925
      %v927 = vpop.f32.mrf.mxu0
      %928 = vmatprep.mubr.bf16.mxu0 0
      %929 = vmatmul.mubr.bf16.gmra.mxu0 %v671
      %v930 = vpop.f32.mrf.mxu0
      %v931 = vadd.f32 0.0, %v930
      %v932 = vpop.f32.mrf.mxu0
      %v933 = vpop.f32.mrf.mxu0
      %v934 = vadd.f32 0.0, %v933
      %v935 = vpop.f32.mrf.mxu0
      %936 = vmatprep.mubr.bf16.mxu0 0
      %937 = vmatmul.mubr.bf16.gmra.mxu0 %v674
      %v938 = vpop.f32.mrf.mxu0
      %v939 = vadd.f32 0.0, %v938
      %v940 = vpop.f32.mrf.mxu0
      %v941 = vpop.f32.mrf.mxu0
      %v942 = vadd.f32 0.0, %v941
      %v943 = vpop.f32.mrf.mxu0
      %944 = vmatprep.mubr.bf16.mxu0 0
      %945 = vmatmul.mubr.bf16.gmra.mxu0 %v677
      %v946 = vpop.f32.mrf.mxu0
      %v947 = vadd.f32 0.0, %v946
      %v948 = vpop.f32.mrf.mxu0
      %v949 = vpop.f32.mrf.mxu0
      %v950 = vadd.f32 0.0, %v949
      %v951 = vpop.f32.mrf.mxu0
      %952 = vmatprep.mubr.bf16.mxu0 0
      %953 = vmatmul.mubr.bf16.gmra.mxu0 %v680
      %v954 = vpop.f32.mrf.mxu0
      %v955 = vadd.f32 0.0, %v954
      %v956 = vpop.f32.mrf.mxu0
      %v957 = vpop.f32.mrf.mxu0
      %v958 = vadd.f32 0.0, %v957
      %v959 = vpop.f32.mrf.mxu0
      %960 = vmatprep.mubr.bf16.mxu0 0
      %961 = vmatmul.mubr.bf16.gmra.mxu0 %v683
      %v962 = vpop.f32.mrf.mxu0
      %v963 = vadd.f32 0.0, %v962
      %v964 = vpop.f32.mrf.mxu0
      %v965 = vpop.f32.mrf.mxu0
      %v966 = vadd.f32 0.0, %v965
      %v967 = vpop.f32.mrf.mxu0
      %968 = vmatprep.mubr.bf16.mxu0 0
      %969 = vmatmul.mubr.bf16.gmra.mxu0 %v686
      %v970 = vpop.f32.mrf.mxu0
      %v971 = vadd.f32 0.0, %v970
      %v972 = vpop.f32.mrf.mxu0
      %v973 = vpop.f32.mrf.mxu0
      %v974 = vadd.f32 0.0, %v973
      %v975 = vpop.f32.mrf.mxu0
      %976 = vdwg.mxu0
      %vm977 = vcmask 64512
      %978 = vst.msk [vmem:[%s278] sm:$0xff] %vm977, %v723
      %979 = vst.msk [vmem:[%s278 + $0x8] sm:$0xff] %vm977, %v726
      %980 = vst.msk [vmem:[%s278 + $0x10] sm:$0xff] %vm977, %v731
      %981 = vst.msk [vmem:[%s278 + $0x18] sm:$0xff] %vm977, %v734
      %982 = vst.msk [vmem:[%s278 + $0x20] sm:$0xff] %vm977, %v739
      %983 = vst.msk [vmem:[%s278 + $0x28] sm:$0xff] %vm977, %v742
      %984 = vst.msk [vmem:[%s278 + $0x30] sm:$0xff] %vm977, %v747
      %985 = vst.msk [vmem:[%s278 + $0x38] sm:$0xff] %vm977, %v750
      %986 = vst.msk [vmem:[%s278 + $0x40] sm:$0xff] %vm977, %v755
      %987 = vst.msk [vmem:[%s278 + $0x48] sm:$0xff] %vm977, %v758
      %988 = vst.msk [vmem:[%s278 + $0x50] sm:$0xff] %vm977, %v763
      %989 = vst.msk [vmem:[%s278 + $0x58] sm:$0xff] %vm977, %v766
      %990 = vst.msk [vmem:[%s278 + $0x60] sm:$0xff] %vm977, %v771
      %991 = vst.msk [vmem:[%s278 + $0x68] sm:$0xff] %vm977, %v774
      %992 = vst.msk [vmem:[%s278 + $0x70] sm:$0xff] %vm977, %v779
      %993 = vst.msk [vmem:[%s278 + $0x78] sm:$0xff] %vm977, %v782
      %994 = vst.msk [vmem:[%s278 + $0x80] sm:$0xff] %vm977, %v787
      %995 = vst.msk [vmem:[%s278 + $0x88] sm:$0xff] %vm977, %v790
      %996 = vst.msk [vmem:[%s278 + $0x90] sm:$0xff] %vm977, %v795
      %997 = vst.msk [vmem:[%s278 + $0x98] sm:$0xff] %vm977, %v798
      %998 = vst.msk [vmem:[%s278 + $0xa0] sm:$0xff] %vm977, %v803
      %999 = vst.msk [vmem:[%s278 + $0xa8] sm:$0xff] %vm977, %v806
      %1000 = vst.msk [vmem:[%s278 + $0xb0] sm:$0xff] %vm977, %v811
      %1001 = vst.msk [vmem:[%s278 + $0xb8] sm:$0xff] %vm977, %v814
      %1002 = vst.msk [vmem:[%s278 + $0xc0] sm:$0xff] %vm977, %v819
      %1003 = vst.msk [vmem:[%s278 + $0xc8] sm:$0xff] %vm977, %v822
      %1004 = vst.msk [vmem:[%s278 + $0xd0] sm:$0xff] %vm977, %v827
      %1005 = vst.msk [vmem:[%s278 + $0xd8] sm:$0xff] %vm977, %v830
      %1006 = vst.msk [vmem:[%s278 + $0xe0] sm:$0xff] %vm977, %v835
      %1007 = vst.msk [vmem:[%s278 + $0xe8] sm:$0xff] %vm977, %v838
      %1008 = vst.msk [vmem:[%s278 + $0xf0] sm:$0xff] %vm977, %v843
      %1009 = vst.msk [vmem:[%s278 + $0xf8] sm:$0xff] %vm977, %v846
      %1010 = vst.msk [vmem:[%s278 + $0x100] sm:$0xff] %vm977, %v851
      %1011 = vst.msk [vmem:[%s278 + $0x108] sm:$0xff] %vm977, %v854
      %1012 = vst.msk [vmem:[%s278 + $0x110] sm:$0xff] %vm977, %v859
      %1013 = vst.msk [vmem:[%s278 + $0x118] sm:$0xff] %vm977, %v862
      %1014 = vst.msk [vmem:[%s278 + $0x120] sm:$0xff] %vm977, %v867
      %1015 = vst.msk [vmem:[%s278 + $0x128] sm:$0xff] %vm977, %v870
      %1016 = vst.msk [vmem:[%s278 + $0x130] sm:$0xff] %vm977, %v875
      %1017 = vst.msk [vmem:[%s278 + $0x138] sm:$0xff] %vm977, %v878
      %1018 = vst.msk [vmem:[%s278 + $0x140] sm:$0xff] %vm977, %v883
      %1019 = vst.msk [vmem:[%s278 + $0x148] sm:$0xff] %vm977, %v886
      %1020 = vst.msk [vmem:[%s278 + $0x150] sm:$0xff] %vm977, %v891
      %1021 = vst.msk [vmem:[%s278 + $0x158] sm:$0xff] %vm977, %v894
      %1022 = vst.msk [vmem:[%s278 + $0x160] sm:$0xff] %vm977, %v899
      %1023 = vst.msk [vmem:[%s278 + $0x168] sm:$0xff] %vm977, %v902
      %1024 = vst.msk [vmem:[%s278 + $0x170] sm:$0xff] %vm977, %v907
      %1025 = vst.msk [vmem:[%s278 + $0x178] sm:$0xff] %vm977, %v910
      %1026 = vst.msk [vmem:[%s278 + $0x180] sm:$0xff] %vm977, %v915
      %1027 = vst.msk [vmem:[%s278 + $0x188] sm:$0xff] %vm977, %v918
      %1028 = vst.msk [vmem:[%s278 + $0x190] sm:$0xff] %vm977, %v923
      %1029 = vst.msk [vmem:[%s278 + $0x198] sm:$0xff] %vm977, %v926
      %1030 = vst.msk [vmem:[%s278 + $0x1a0] sm:$0xff] %vm977, %v931
      %1031 = vst.msk [vmem:[%s278 + $0x1a8] sm:$0xff] %vm977, %v934
      %1032 = vst.msk [vmem:[%s278 + $0x1b0] sm:$0xff] %vm977, %v939
      %1033 = vst.msk [vmem:[%s278 + $0x1b8] sm:$0xff] %vm977, %v942
      %1034 = vst.msk [vmem:[%s278 + $0x1c0] sm:$0xff] %vm977, %v947
      %1035 = vst.msk [vmem:[%s278 + $0x1c8] sm:$0xff] %vm977, %v950
      %1036 = vst.msk [vmem:[%s278 + $0x1d0] sm:$0xff] %vm977, %v955
      %1037 = vst.msk [vmem:[%s278 + $0x1d8] sm:$0xff] %vm977, %v958
      %1038 = vst.msk [vmem:[%s278 + $0x1e0] sm:$0xff] %vm977, %v963
      %1039 = vst.msk [vmem:[%s278 + $0x1e8] sm:$0xff] %vm977, %v966
      %1040 = vst.msk [vmem:[%s278 + $0x1f0] sm:$0xff] %vm977, %v971
      %1041 = vst.msk [vmem:[%s278 + $0x1f8] sm:$0xff] %vm977, %v974
      %1042 = vmatprep.subr.mxu0 0.0
      %1043 = vmatpush1.msra.mxu0 %v782
      %1044 = vmatprep.subr.mxu0 0.0
      %1045 = vmatpush1.msra.mxu0 %v779
      %1046 = vmatprep.subr.mxu0 0.0
      %1047 = vmatpush1.msra.mxu0 %v774
      %1048 = vmatprep.subr.mxu0 0.0
      %1049 = vmatpush1.msra.mxu0 %v771
      %1050 = vmatprep.subr.mxu0 0.0
      %1051 = vmatpush1.msra.mxu0 %v766
      %1052 = vmatprep.subr.mxu0 0.0
      %1053 = vmatpush1.msra.mxu0 %v763
      %1054 = vmatprep.subr.mxu0 0.0
      %1055 = vmatpush1.msra.mxu0 %v758
      %1056 = vmatprep.subr.mxu0 0.0
      %1057 = vmatpush1.msra.mxu0 %v755
      %1058 = vmatprep.subr.mxu0 0.0
      %1059 = vmatpush1.msra.mxu0 %v750
      %1060 = vmatprep.subr.mxu0 0.0
      %1061 = vmatpush1.msra.mxu0 %v747
      %1062 = vmatprep.subr.mxu0 0.0
      %1063 = vmatpush1.msra.mxu0 %v742
      %1064 = vmatprep.subr.mxu0 0.0
      %1065 = vmatpush1.msra.mxu0 %v739
      %1066 = vmatprep.subr.mxu0 0.0
      %1067 = vmatpush1.msra.mxu0 %v734
      %1068 = vmatprep.subr.mxu0 0.0
      %1069 = vmatpush1.msra.mxu0 %v731
      %1070 = vmatprep.subr.mxu0 0.0
      %1071 = vmatpush1.msra.mxu0 %v726
      %1072 = vmatprep.subr.mxu0 0.0
      %1073 = vmatpush1.msra.mxu0 %v723
      %1074 = vmatprep.subr.mxu0 0.0
      %1075 = vmatpush2.msra.mxu0 %v846
      %1076 = vmatprep.subr.mxu0 0.0
      %1077 = vmatpush2.msra.mxu0 %v843
      %1078 = vmatprep.subr.mxu0 0.0
      %1079 = vmatpush2.msra.mxu0 %v838
      %1080 = vmatprep.subr.mxu0 0.0
      %1081 = vmatpush2.msra.mxu0 %v835
      %1082 = vmatprep.subr.mxu0 0.0
      %1083 = vmatpush2.msra.mxu0 %v830
      %1084 = vmatprep.subr.mxu0 0.0
      %1085 = vmatpush2.msra.mxu0 %v827
      %1086 = vmatprep.subr.mxu0 0.0
      %1087 = vmatpush2.msra.mxu0 %v822
      %1088 = vmatprep.subr.mxu0 0.0
      %1089 = vmatpush2.msra.mxu0 %v819
      %1090 = vmatprep.subr.mxu0 0.0
      %1091 = vmatpush2.msra.mxu0 %v814
      %1092 = vmatprep.subr.mxu0 0.0
      %1093 = vmatpush2.msra.mxu0 %v811
      %1094 = vmatprep.subr.mxu0 0.0
      %1095 = vmatpush2.msra.mxu0 %v806
      %1096 = vmatprep.subr.mxu0 0.0
      %1097 = vmatpush2.msra.mxu0 %v803
      %1098 = vmatprep.subr.mxu0 0.0
      %1099 = vmatpush2.msra.mxu0 %v798
      %1100 = vmatprep.subr.mxu0 0.0
      %1101 = vmatpush2.msra.mxu0 %v795
      %1102 = vmatprep.subr.mxu0 0.0
      %1103 = vmatpush2.msra.mxu0 %v790
      %1104 = vmatprep.subr.mxu0 0.0
      %1105 = vmatpush2.msra.mxu0 %v787
      %1106 = vmatprep.mubr.f32.mxu0 1.0
      %1107 = vmatmul.mubr.f32.gmra.mxu0 1.0
      %v1108 = vpop.f32.mrf.mxu0
      %v1109 = vadd.f32 0.0, %v1108
      %v1110 = vpop.f32.mrf.mxu0
      %1111 = vdwg.mxu0
      %1112 = vmatprep.subr.mxu0 0.0
      %1113 = vmatpush1.msra.mxu0 %v910
      %1114 = vmatprep.subr.mxu0 0.0
      %1115 = vmatpush1.msra.mxu0 %v907
      %1116 = vmatprep.subr.mxu0 0.0
      %1117 = vmatpush1.msra.mxu0 %v902
      %1118 = vmatprep.subr.mxu0 0.0
      %1119 = vmatpush1.msra.mxu0 %v899
      %1120 = vmatprep.subr.mxu0 0.0
      %1121 = vmatpush1.msra.mxu0 %v894
      %1122 = vmatprep.subr.mxu0 0.0
      %1123 = vmatpush1.msra.mxu0 %v891
      %1124 = vmatprep.subr.mxu0 0.0
      %1125 = vmatpush1.msra.mxu0 %v886
      %1126 = vmatprep.subr.mxu0 0.0
      %1127 = vmatpush1.msra.mxu0 %v883
      %1128 = vmatprep.subr.mxu0 0.0
      %1129 = vmatpush1.msra.mxu0 %v878
      %1130 = vmatprep.subr.mxu0 0.0
      %1131 = vmatpush1.msra.mxu0 %v875
      %1132 = vmatprep.subr.mxu0 0.0
      %1133 = vmatpush1.msra.mxu0 %v870
      %1134 = vmatprep.subr.mxu0 0.0
      %1135 = vmatpush1.msra.mxu0 %v867
      %1136 = vmatprep.subr.mxu0 0.0
      %1137 = vmatpush1.msra.mxu0 %v862
      %1138 = vmatprep.subr.mxu0 0.0
      %1139 = vmatpush1.msra.mxu0 %v859
      %1140 = vmatprep.subr.mxu0 0.0
      %1141 = vmatpush1.msra.mxu0 %v854
      %1142 = vmatprep.subr.mxu0 0.0
      %1143 = vmatpush1.msra.mxu0 %v851
      %1144 = vmatprep.subr.mxu0 0.0
      %1145 = vmatpush2.msra.mxu0 %v974
      %1146 = vmatprep.subr.mxu0 0.0
      %1147 = vmatpush2.msra.mxu0 %v971
      %1148 = vmatprep.subr.mxu0 0.0
      %1149 = vmatpush2.msra.mxu0 %v966
      %1150 = vmatprep.subr.mxu0 0.0
      %1151 = vmatpush2.msra.mxu0 %v963
      %1152 = vmatprep.subr.mxu0 0.0
      %1153 = vmatpush2.msra.mxu0 %v958
      %1154 = vmatprep.subr.mxu0 0.0
      %1155 = vmatpush2.msra.mxu0 %v955
      %1156 = vmatprep.subr.mxu0 0.0
      %1157 = vmatpush2.msra.mxu0 %v950
      %1158 = vmatprep.subr.mxu0 0.0
      %1159 = vmatpush2.msra.mxu0 %v947
      %1160 = vmatprep.subr.mxu0 0.0
      %1161 = vmatpush2.msra.mxu0 %v942
      %1162 = vmatprep.subr.mxu0 0.0
      %1163 = vmatpush2.msra.mxu0 %v939
      %1164 = vmatprep.subr.mxu0 0.0
      %1165 = vmatpush2.msra.mxu0 %v934
      %1166 = vmatprep.subr.mxu0 0.0
      %1167 = vmatpush2.msra.mxu0 %v931
      %1168 = vmatprep.subr.mxu0 0.0
      %1169 = vmatpush2.msra.mxu0 %v926
      %1170 = vmatprep.subr.mxu0 0.0
      %1171 = vmatpush2.msra.mxu0 %v923
      %1172 = vmatprep.subr.mxu0 0.0
      %1173 = vmatpush2.msra.mxu0 %v918
      %1174 = vmatprep.subr.mxu0 0.0
      %1175 = vmatpush2.msra.mxu0 %v915
      %1176 = vmatprep.mubr.f32.mxu0 1.0
      %1177 = vmatmul.mubr.f32.gmra.mxu0 1.0
      %v1178 = vpop.f32.mrf.mxu0
      %v1179 = vadd.f32 %v1109, %v1178
      %v1180 = vpop.f32.mrf.mxu0
      %1181 = vdwg.mxu0
      %v1182 = vmul.f32 %v723, %v723
      %v1183 = vmul.f32 %v726, %v726
      %v1184 = vmul.f32 %v731, %v731
      %v1185 = vmul.f32 %v734, %v734
      %v1186 = vmul.f32 %v739, %v739
      %v1187 = vmul.f32 %v742, %v742
      %v1188 = vmul.f32 %v747, %v747
      %v1189 = vmul.f32 %v750, %v750
      %v1190 = vmul.f32 %v755, %v755
      %v1191 = vmul.f32 %v758, %v758
      %v1192 = vmul.f32 %v763, %v763
      %v1193 = vmul.f32 %v766, %v766
      %v1194 = vmul.f32 %v771, %v771
      %v1195 = vmul.f32 %v774, %v774
      %v1196 = vmul.f32 %v779, %v779
      %v1197 = vmul.f32 %v782, %v782
      %v1198 = vmul.f32 %v787, %v787
      %v1199 = vmul.f32 %v790, %v790
      %v1200 = vmul.f32 %v795, %v795
      %v1201 = vmul.f32 %v798, %v798
      %v1202 = vmul.f32 %v803, %v803
      %v1203 = vmul.f32 %v806, %v806
      %v1204 = vmul.f32 %v811, %v811
      %v1205 = vmul.f32 %v814, %v814
      %v1206 = vmul.f32 %v819, %v819
      %v1207 = vmul.f32 %v822, %v822
      %v1208 = vmul.f32 %v827, %v827
      %v1209 = vmul.f32 %v830, %v830
      %v1210 = vmul.f32 %v835, %v835
      %v1211 = vmul.f32 %v838, %v838
      %v1212 = vmul.f32 %v843, %v843
      %v1213 = vmul.f32 %v846, %v846
      %v1214 = vmul.f32 %v851, %v851
      %v1215 = vmul.f32 %v854, %v854
      %v1216 = vmul.f32 %v859, %v859
      %v1217 = vmul.f32 %v862, %v862
      %v1218 = vmul.f32 %v867, %v867
      %v1219 = vmul.f32 %v870, %v870
      %v1220 = vmul.f32 %v875, %v875
      %v1221 = vmul.f32 %v878, %v878
      %v1222 = vmul.f32 %v883, %v883
      %v1223 = vmul.f32 %v886, %v886
      %v1224 = vmul.f32 %v891, %v891
      %v1225 = vmul.f32 %v894, %v894
      %v1226 = vmul.f32 %v899, %v899
      %v1227 = vmul.f32 %v902, %v902
      %v1228 = vmul.f32 %v907, %v907
      %v1229 = vmul.f32 %v910, %v910
      %v1230 = vmul.f32 %v915, %v915
      %v1231 = vmul.f32 %v918, %v918
      %v1232 = vmul.f32 %v923, %v923
      %v1233 = vmul.f32 %v926, %v926
      %v1234 = vmul.f32 %v931, %v931
      %v1235 = vmul.f32 %v934, %v934
      %v1236 = vmul.f32 %v939, %v939
      %v1237 = vmul.f32 %v942, %v942
      %v1238 = vmul.f32 %v947, %v947
      %v1239 = vmul.f32 %v950, %v950
      %v1240 = vmul.f32 %v955, %v955
      %v1241 = vmul.f32 %v958, %v958
      %v1242 = vmul.f32 %v963, %v963
      %v1243 = vmul.f32 %v966, %v966
      %v1244 = vmul.f32 %v971, %v971
      %v1245 = vmul.f32 %v974, %v974
      %1246 = vmatprep.subr.mxu0 0.0
      %1247 = vmatpush1.msra.mxu0 %v1197
      %1248 = vmatprep.subr.mxu0 0.0
      %1249 = vmatpush1.msra.mxu0 %v1196
      %1250 = vmatprep.subr.mxu0 0.0
      %1251 = vmatpush1.msra.mxu0 %v1195
      %1252 = vmatprep.subr.mxu0 0.0
      %1253 = vmatpush1.msra.mxu0 %v1194
      %1254 = vmatprep.subr.mxu0 0.0
      %1255 = vmatpush1.msra.mxu0 %v1193
      %1256 = vmatprep.subr.mxu0 0.0
      %1257 = vmatpush1.msra.mxu0 %v1192
      %1258 = vmatprep.subr.mxu0 0.0
      %1259 = vmatpush1.msra.mxu0 %v1191
      %1260 = vmatprep.subr.mxu0 0.0
      %1261 = vmatpush1.msra.mxu0 %v1190
      %1262 = vmatprep.subr.mxu0 0.0
      %1263 = vmatpush1.msra.mxu0 %v1189
      %1264 = vmatprep.subr.mxu0 0.0
      %1265 = vmatpush1.msra.mxu0 %v1188
      %1266 = vmatprep.subr.mxu0 0.0
      %1267 = vmatpush1.msra.mxu0 %v1187
      %1268 = vmatprep.subr.mxu0 0.0
      %1269 = vmatpush1.msra.mxu0 %v1186
      %1270 = vmatprep.subr.mxu0 0.0
      %1271 = vmatpush1.msra.mxu0 %v1185
      %1272 = vmatprep.subr.mxu0 0.0
      %1273 = vmatpush1.msra.mxu0 %v1184
      %1274 = vmatprep.subr.mxu0 0.0
      %1275 = vmatpush1.msra.mxu0 %v1183
      %1276 = vmatprep.subr.mxu0 0.0
      %1277 = vmatpush1.msra.mxu0 %v1182
      %1278 = vmatprep.subr.mxu0 0.0
      %1279 = vmatpush2.msra.mxu0 %v1213
      %1280 = vmatprep.subr.mxu0 0.0
      %1281 = vmatpush2.msra.mxu0 %v1212
      %1282 = vmatprep.subr.mxu0 0.0
      %1283 = vmatpush2.msra.mxu0 %v1211
      %1284 = vmatprep.subr.mxu0 0.0
      %1285 = vmatpush2.msra.mxu0 %v1210
      %1286 = vmatprep.subr.mxu0 0.0
      %1287 = vmatpush2.msra.mxu0 %v1209
      %1288 = vmatprep.subr.mxu0 0.0
      %1289 = vmatpush2.msra.mxu0 %v1208
      %1290 = vmatprep.subr.mxu0 0.0
      %1291 = vmatpush2.msra.mxu0 %v1207
      %1292 = vmatprep.subr.mxu0 0.0
      %1293 = vmatpush2.msra.mxu0 %v1206
      %1294 = vmatprep.subr.mxu0 0.0
      %1295 = vmatpush2.msra.mxu0 %v1205
      %1296 = vmatprep.subr.mxu0 0.0
      %1297 = vmatpush2.msra.mxu0 %v1204
      %1298 = vmatprep.subr.mxu0 0.0
      %1299 = vmatpush2.msra.mxu0 %v1203
      %1300 = vmatprep.subr.mxu0 0.0
      %1301 = vmatpush2.msra.mxu0 %v1202
      %1302 = vmatprep.subr.mxu0 0.0
      %1303 = vmatpush2.msra.mxu0 %v1201
      %1304 = vmatprep.subr.mxu0 0.0
      %1305 = vmatpush2.msra.mxu0 %v1200
      %1306 = vmatprep.subr.mxu0 0.0
      %1307 = vmatpush2.msra.mxu0 %v1199
      %1308 = vmatprep.subr.mxu0 0.0
      %1309 = vmatpush2.msra.mxu0 %v1198
      %1310 = vmatprep.mubr.f32.mxu0 1.0
      %1311 = vmatmul.mubr.f32.gmra.mxu0 1.0
      %v1312 = vpop.f32.mrf.mxu0
      %v1313 = vadd.f32 0.0, %v1312
      %v1314 = vpop.f32.mrf.mxu0
      %1315 = vdwg.mxu0
      %1316 = vmatprep.subr.mxu0 0.0
      %1317 = vmatpush1.msra.mxu0 %v1229
      %1318 = vmatprep.subr.mxu0 0.0
      %1319 = vmatpush1.msra.mxu0 %v1228
      %1320 = vmatprep.subr.mxu0 0.0
      %1321 = vmatpush1.msra.mxu0 %v1227
      %1322 = vmatprep.subr.mxu0 0.0
      %1323 = vmatpush1.msra.mxu0 %v1226
      %1324 = vmatprep.subr.mxu0 0.0
      %1325 = vmatpush1.msra.mxu0 %v1225
      %1326 = vmatprep.subr.mxu0 0.0
      %1327 = vmatpush1.msra.mxu0 %v1224
      %1328 = vmatprep.subr.mxu0 0.0
      %1329 = vmatpush1.msra.mxu0 %v1223
      %1330 = vmatprep.subr.mxu0 0.0
      %1331 = vmatpush1.msra.mxu0 %v1222
      %1332 = vmatprep.subr.mxu0 0.0
      %1333 = vmatpush1.msra.mxu0 %v1221
      %1334 = vmatprep.subr.mxu0 0.0
      %1335 = vmatpush1.msra.mxu0 %v1220
      %1336 = vmatprep.subr.mxu0 0.0
      %1337 = vmatpush1.msra.mxu0 %v1219
      %1338 = vmatprep.subr.mxu0 0.0
      %1339 = vmatpush1.msra.mxu0 %v1218
      %1340 = vmatprep.subr.mxu0 0.0
      %1341 = vmatpush1.msra.mxu0 %v1217
      %1342 = vmatprep.subr.mxu0 0.0
      %1343 = vmatpush1.msra.mxu0 %v1216
      %1344 = vmatprep.subr.mxu0 0.0
      %1345 = vmatpush1.msra.mxu0 %v1215
      %1346 = vmatprep.subr.mxu0 0.0
      %1347 = vmatpush1.msra.mxu0 %v1214
      %1348 = vmatprep.subr.mxu0 0.0
      %1349 = vmatpush2.msra.mxu0 %v1245
      %1350 = vmatprep.subr.mxu0 0.0
      %1351 = vmatpush2.msra.mxu0 %v1244
      %1352 = vmatprep.subr.mxu0 0.0
      %1353 = vmatpush2.msra.mxu0 %v1243
      %1354 = vmatprep.subr.mxu0 0.0
      %1355 = vmatpush2.msra.mxu0 %v1242
      %1356 = vmatprep.subr.mxu0 0.0
      %1357 = vmatpush2.msra.mxu0 %v1241
      %1358 = vmatprep.subr.mxu0 0.0
      %1359 = vmatpush2.msra.mxu0 %v1240
      %1360 = vmatprep.subr.mxu0 0.0
      %1361 = vmatpush2.msra.mxu0 %v1239
      %1362 = vmatprep.subr.mxu0 0.0
      %1363 = vmatpush2.msra.mxu0 %v1238
      %1364 = vmatprep.subr.mxu0 0.0
      %1365 = vmatpush2.msra.mxu0 %v1237
      %1366 = vmatprep.subr.mxu0 0.0
      %1367 = vmatpush2.msra.mxu0 %v1236
      %1368 = vmatprep.subr.mxu0 0.0
      %1369 = vmatpush2.msra.mxu0 %v1235
      %1370 = vmatprep.subr.mxu0 0.0
      %1371 = vmatpush2.msra.mxu0 %v1234
      %1372 = vmatprep.subr.mxu0 0.0
      %1373 = vmatpush2.msra.mxu0 %v1233
      %1374 = vmatprep.subr.mxu0 0.0
      %1375 = vmatpush2.msra.mxu0 %v1232
      %1376 = vmatprep.subr.mxu0 0.0
      %1377 = vmatpush2.msra.mxu0 %v1231
      %1378 = vmatprep.subr.mxu0 0.0
      %1379 = vmatpush2.msra.mxu0 %v1230
      %1380 = vmatprep.mubr.f32.mxu0 1.0
      %1381 = vmatmul.mubr.f32.gmra.mxu0 1.0
      %v1382 = vpop.f32.mrf.mxu0
      %v1383 = vadd.f32 %v1313, %v1382
      %v1384 = vpop.f32.mrf.mxu0
      %1385 = vdwg.mxu0
      %1386 = vst.msk [vmem:[%s286] sm:$0xff] %vm977, %v1179
      %1387 = vst.msk [vmem:[%s293] sm:$0xff] %vm977, %v1383
      %s1388 = smul.u32 64, %s21
      %p1389 = scmp.lt.s32.totalorder %s20, 3
      %s1390 = scalar_select %p1389, %s20, 3
      %p1391 = scmp.lt.s32.totalorder %s1388, 63
      %s1392 = scalar_select %p1391, %s1388, 63
      %s1393 = smul.addr %s1390, 64
      %s1394 = sadd.s32 %s1392, %s1393
      %s1395 = smul.addr %s1394, 8
      %s1396 = scalar_lea.vmem %s2, %s1395
      %p1397 = scmp.lt.s32.totalorder %s20, 3
      %s1398 = scalar_select %p1397, %s20, 3
      %p1399 = scmp.lt.s32.totalorder %s21, 0
      %s1400 = scalar_select %p1399, %s21, 0
      %s1401 = sadd.s32 %s1400, %s1398
      %s1402 = smul.addr %s1401, 8
      %s1403 = scalar_lea.vmem %s3, %s1402
      %p1404 = scmp.lt.s32.totalorder %s20, 3
      %s1405 = scalar_select %p1404, %s20, 3
      %p1406 = scmp.lt.s32.totalorder %s21, 0
      %s1407 = scalar_select %p1406, %s21, 0
      %s1408 = sadd.s32 %s1407, %s1405
      %s1409 = smul.addr %s1408, 8
      %s1410 = scalar_lea.vmem %s4, %s1409
      // Predicated region
      $region29: #{up_block_forward.2} parent=27 // pred_check
        %p1411 = pneg %p102
      $region30: #{up_block_forward.2} parent=27 // pred_check_branch
        %1413 = sbr.rel (%p1411) target = $region32
      $region31: #{up_block_forward.2} parent=27 // pred_region
        %s1414 = smul.u32 64, %s21
      $region32: #{up_block_forward.2} parent=27 // pred_fallthru
        _
      // Predicated region
      $region33: #{up_block_forward.2} parent=27 // pred_check
        %p1415 = pneg %p130
      $region34: #{up_block_forward.2} parent=27 // pred_check_branch
        %1417 = sbr.rel (%p1415) target = $region36
      $region35: #{up_block_forward.2} parent=27 // pred_region
        _
      $region36: #{up_block_forward.2} parent=27 // pred_fallthru
        _
      // Predicated region
      $region37: #{up_block_forward.2} parent=27 // pred_check
        %p1418 = pneg %p158
      $region38: #{up_block_forward.2} parent=27 // pred_check_branch
        %1420 = sbr.rel (%p1418) target = $region40
      $region39: #{up_block_forward.2} parent=27 // pred_region
        _
      $region40: #{up_block_forward.2} parent=27 // pred_fallthru
        _
    $region28: #{up_block_forward.2} parent=5 // pred_fallthru
      _
    %p1421 = scmp.le.s32.totalorder 2, %s11
    // Predicated region
    $region41: #{up_block_forward.2} parent=5 // pred_check
      %p1422 = pneg %p1421
    $region42: #{up_block_forward.2} parent=5 // pred_check_branch
      %1424 = sbr.rel (%p1422) target = $region44
    $region43: #{up_block_forward.2} parent=5 // pred_region
      %s1425 = ssub.s32 %s11, 2
      // Predicated region
      $region45: #{up_block_forward.2} parent=43 // pred_check
        %p1426 = pneg %p108
      $region46: #{up_block_forward.2} parent=43 // pred_check_branch
        %1428 = sbr.rel (%p1426) target = $region48
      $region47: #{up_block_forward.2} parent=43 // pred_region
        %s1429 = smul.u32 64, %s23
        %p1430 = scmp.lt.s32.totalorder %s22, 3
        %s1431 = scalar_select %p1430, %s22, 3
        %p1432 = scmp.lt.s32.totalorder %s1429, 63
        %s1433 = scalar_select %p1432, %s1429, 63
        %s1434 = smul.addr %s1431, 64
        %s1435 = sadd.s32 %s1433, %s1434
        %s1436 = smul.addr %s1435, 8
        %s1437 = scalar_lea.vmem %s2, %s1436
      $region48: #{up_block_forward.2} parent=43 // pred_fallthru
        _
      // Predicated region
      $region49: #{up_block_forward.2} parent=43 // pred_check
        %p1438 = pneg %p136
      $region50: #{up_block_forward.2} parent=43 // pred_check_branch
        %1440 = sbr.rel (%p1438) target = $region52
      $region51: #{up_block_forward.2} parent=43 // pred_region
        %p1441 = scmp.lt.s32.totalorder %s22, 3
        %s1442 = scalar_select %p1441, %s22, 3
        %p1443 = scmp.lt.s32.totalorder %s23, 0
        %s1444 = scalar_select %p1443, %s23, 0
        %s1445 = sadd.s32 %s1444, %s1442
        %s1446 = smul.addr %s1445, 8
        %s1447 = scalar_lea.vmem %s3, %s1446
      $region52: #{up_block_forward.2} parent=43 // pred_fallthru
        _
      // Predicated region
      $region53: #{up_block_forward.2} parent=43 // pred_check
        %p1448 = pneg %p164
      $region54: #{up_block_forward.2} parent=43 // pred_check_branch
        %1450 = sbr.rel (%p1448) target = $region56
      $region55: #{up_block_forward.2} parent=43 // pred_region
        %p1451 = scmp.lt.s32.totalorder %s22, 3
        %s1452 = scalar_select %p1451, %s22, 3
        %p1453 = scmp.lt.s32.totalorder %s23, 0
        %s1454 = scalar_select %p1453, %s23, 0
        %s1455 = sadd.s32 %s1454, %s1452
        %s1456 = smul.addr %s1455, 8
        %s1457 = scalar_lea.vmem %s4, %s1456
      $region56: #{up_block_forward.2} parent=43 // pred_fallthru
        _
    $region44: #{up_block_forward.2} parent=5 // pred_fallthru
      _
  $region6: #{up_block_forward.2} parent=0 // loop_footer
    %s15 = sadd.s32 1, %s11
  $region7: #{up_block_forward.2} parent=0 // loop_footer_branch
    %10 = sbr.rel target = $region3
  $region8: #{up_block_forward.2} parent=0 // loop_exit
    _

</llo_original>
